<compile_context>
chip_gen: v7x
topology: tpu7x:2x2x1
jax: 0.10.0
libtpu: 0.0.40
codegen_flags: <defaults>
</compile_context>

<pallas_src>
import functools
import math

import jax
import jax.numpy as jnp
from jax.experimental import pallas as pl
from jax.experimental.pallas import tpu as pltpu

NEG_INF = -1e30


def _flash_fwd_kernel(*refs, scale, causal, has_bias, tq, tk, nk, exp_dtype):
    """Online-softmax flash-attention step for one (head, kept (qi,ki) block)."""
    if has_bias:
        (qi_tbl, ki_tbl, q_ref, k_ref, v_ref, bias_ref,
         o_ref, m_sc, l_sc, acc_sc) = refs
    else:
        (qi_tbl, ki_tbl, q_ref, k_ref, v_ref,
         o_ref, m_sc, l_sc, acc_sc) = refs
        bias_ref = None

    j = pl.program_id(1)
    qi = qi_tbl[j]          # query-block index (SMEM scalar)
    ki = ki_tbl[j]          # key-block index   (SMEM scalar)

    @pl.when(ki == 0)
    def _init():
        m_sc[...] = jnp.full_like(m_sc, -jnp.inf)
        l_sc[...] = jnp.zeros_like(l_sc)
        acc_sc[...] = jnp.zeros_like(acc_sc)

    def _step(apply_mask):
        # Squeeze the size-1 head dim; fold the softmax scale into Q
        # (tq*D mults instead of tq*tk on the f32 score slab).
        q = q_ref[0] * scale                       # (tq, D) bf16
        k = k_ref[0]                               # (tk, D) bf16
        v = v_ref[0]                               # (tk, D) bf16

        # QK^T on the MXU, f32 accumulation.
        s = jax.lax.dot_general(
            q, k, (((1,), (1,)), ((), ())),
            preferred_element_type=jnp.float32)    # (tq, tk) f32

        if has_bias:
            s = s + bias_ref[...].reshape(1, tk)   # additive key bias (0 / -1e30)

        if apply_mask:                             # only diagonal-straddling blocks
            q_pos = qi * tq + jax.lax.broadcasted_iota(jnp.int32, (tq, tk), 0)
            k_pos = ki * tk + jax.lax.broadcasted_iota(jnp.int32, (tq, tk), 1)
            s = jnp.where(q_pos >= k_pos, s, NEG_INF)

        m_prev = m_sc[...]                         # (tq, 1) f32
        m_new = jnp.maximum(m_prev, s.max(axis=-1, keepdims=True))
        alpha = jnp.exp(m_prev - m_new)            # f32 (tiny)
        # exp in bf16 on v6e/v7x (bf16 EUP), f32 elsewhere.
        p = jnp.exp((s - m_new).astype(exp_dtype))

        l_sc[...] = alpha * l_sc[...] + p.sum(axis=-1, keepdims=True,
                                              dtype=jnp.float32)
        acc_sc[...] = alpha * acc_sc[...] + jax.lax.dot_general(
            p.astype(v.dtype), v, (((1,), (0,)), ((), ())),
            preferred_element_type=jnp.float32)
        m_sc[...] = m_new

    if causal:
        # Blocks in the prefetch table are all at least partially visible;
        # only apply the iota mask on blocks that straddle the diagonal.
        fully_visible = qi * tq >= ki * tk + (tk - 1)

        @pl.when(fully_visible)
        def _():
            _step(False)

        @pl.when(jnp.logical_not(fully_visible))
        def _():
            _step(True)

        last_ki = jnp.minimum(nk - 1, (qi * tq + tq - 1) // tk)
    else:
        _step(False)
        last_ki = nk - 1

    @pl.when(ki == last_ki)
    def _finalize():
        inv_l = pl.reciprocal(l_sc[...], approx=True)
        o_ref[0] = (acc_sc[...] * inv_l).astype(o_ref.dtype)


def _round_up(x, m):
    return ((x + m - 1) // m) * m


def _choose_tile(dim, requested):
    """Tile <= requested (multiple of 8) minimizing padding of `dim`."""
    requested = max(8, int(requested))
    nblk = -(-int(dim) // requested)          # cdiv
    tile = -(-int(dim) // nblk)               # cdiv
    return max(8, _round_up(tile, 8))


def _device_kind():
    try:
        return jax.devices()[0].device_kind.lower()
    except Exception:
        return ""


def flash_attention(q, kv, softmax_scale=None, causal=False,
                    key_padding_mask=None, tq=512, tk=512):
    """Pallas equivalent of FlashAttention.forward. Returns (out_fp32, None)."""
    assert q.dtype in (jnp.float16, jnp.bfloat16)
    assert kv.dtype in (jnp.float16, jnp.bfloat16)
    B, T, H, D = q.shape
    Bk, S, two, Hk, Dk = kv.shape
    assert B == Bk and two == 2 and H == Hk and D == Dk

    # fp16 is not a native MXU/VPU type on TPU; convert once to bf16.
    if q.dtype == jnp.float16:
        q = q.astype(jnp.bfloat16)
    if kv.dtype == jnp.float16:
        kv = kv.astype(jnp.bfloat16)

    scale = float(softmax_scale) if softmax_scale is not None else 1.0 / math.sqrt(D)

    tq = _choose_tile(T, tq)
    tk = _choose_tile(S, tk)
    T_pad = -(-T // tq) * tq
    S_pad = -(-S // tk) * tk
    nq, nk = T_pad // tq, S_pad // tk

    # Key bias (0 keep / -1e30 drop). Also used to mask padded key rows.
    needs_key_mask = (key_padding_mask is not None) or (S_pad != S)
    if needs_key_mask:
        if key_padding_mask is None:
            kpm = jnp.broadcast_to((jnp.arange(S_pad) < S)[None, :], (B, S_pad))
        else:
            kpm = key_padding_mask.astype(bool)
            if S_pad != S:
                kpm = jnp.pad(kpm, ((0, 0), (0, S_pad - S)), constant_values=False)
        bias = jnp.where(kpm, 0.0, NEG_INF).astype(jnp.float32)
        bias = bias.reshape(B, nk, 1, tk)      # block (1,1,1,tk): full last-2 dims

    if T_pad != T:
        q = jnp.pad(q, ((0, 0), (0, T_pad - T), (0, 0), (0, 0)))
    k = kv[:, :, 0]
    v = kv[:, :, 1]
    if S_pad != S:
        k = jnp.pad(k, ((0, 0), (0, S_pad - S), (0, 0), (0, 0)))
        v = jnp.pad(v, ((0, 0), (0, S_pad - S), (0, 0), (0, 0)))

    # Head-folded layout (B*H, seq, D).
    # TODO(synk): a fully layout-native version over the original
    # (B,T,H,D)/(B,S,2,H,D) arrays would drop these HBM transposes, but needs
    # >=8-head second-minor blocks and batched-head matmuls; kept head-folded
    # for robust Mosaic tiling.
    BH = B * H
    qf = jnp.transpose(q, (0, 2, 1, 3)).reshape(BH, T_pad, D)
    kf = jnp.transpose(k, (0, 2, 1, 3)).reshape(BH, S_pad, D)
    vf = jnp.transpose(v, (0, 2, 1, 3)).reshape(BH, S_pad, D)

    # Enumerate only the (qi, ki) blocks that are actually needed. With
    # causal=True this skips upper-triangular blocks' DMA *and* compute.
    if causal:
        pairs = [(bq, bk) for bq in range(nq) for bk in range(nk)
                 if bq * tq + tq - 1 >= bk * tk]
    else:
        pairs = [(bq, bk) for bq in range(nq) for bk in range(nk)]
    qi_tbl = jnp.asarray([p[0] for p in pairs], dtype=jnp.int32)
    ki_tbl = jnp.asarray([p[1] for p in pairs], dtype=jnp.int32)
    n_blk = len(pairs)

    # Per-generation knobs: bf16 exp on v6e/v7x only (v5e has no bf16 EUP).
    kind = _device_kind()
    older = any(t in kind for t in ("v2", "v3", "v4", "v5"))
    newer = any(t in kind for t in ("v6", "v7", "7x"))
    exp_dtype = jnp.bfloat16 if (newer and not older) else jnp.float32
    # Note: on v5e (most DMA-exposed gen) additionally sweeping
    # pipeline_mode=pl.Buffered(3) on the K/V BlockSpecs is worthwhile.

    q_map = lambda bh, j, qt, kt: (bh, qt[j], 0)
    kv_map = lambda bh, j, qt, kt: (bh, kt[j], 0)

    in_specs = [
        pl.BlockSpec((1, tq, D), q_map),     # Q
        pl.BlockSpec((1, tk, D), kv_map),    # K
        pl.BlockSpec((1, tk, D), kv_map),    # V
    ]
    inputs = [qi_tbl, ki_tbl, qf, kf, vf]
    if needs_key_mask:
        in_specs.append(
            pl.BlockSpec((1, 1, 1, tk),
                         lambda bh, j, qt, kt: (bh // H, kt[j], 0, 0)))
        inputs.append(bias)

    out_specs = pl.BlockSpec((1, tq, D), q_map)

    kernel = functools.partial(_flash_fwd_kernel, scale=scale,
                               causal=bool(causal), has_bias=needs_key_mask,
                               tq=tq, tk=tk, nk=nk, exp_dtype=exp_dtype)

    # Honest VMEM budget: double-buffered Q/K/V/out/bias blocks, f32 scratch,
    # and the (tq, tk) f32 score/probability slabs; capped below v7x 64 MiB.
    itemsize = 2  # bf16
    blk_bytes = (2 * tq * D * itemsize          # Q  (x2 buffers)
                 + 2 * 2 * tk * D * itemsize    # K+V (x2 buffers)
                 + 2 * tq * D * itemsize)       # out (x2 buffers)
    if needs_key_mask:
        blk_bytes += 2 * tk * 4
    scratch_bytes = (2 * tq + tq * D) * 4       # m, l, acc (f32)
    slab_bytes = 4 * tq * tk * 4                # s / p / mask intermediates
    vmem_limit = int(min(max(2 * (blk_bytes + scratch_bytes + slab_bytes),
                             32 * 2 ** 20), 48 * 2 ** 20))

    out_flat = pl.pallas_call(
        kernel,
        out_shape=jax.ShapeDtypeStruct((BH, T_pad, D), qf.dtype),  # bf16
        grid_spec=pltpu.PrefetchScalarGridSpec(
            num_scalar_prefetch=2,
            grid=(BH, n_blk),
            in_specs=in_specs,
            out_specs=out_specs,
            scratch_shapes=[
                pltpu.VMEM((tq, 1), jnp.float32),   # running max m
                pltpu.VMEM((tq, 1), jnp.float32),   # running denom l
                pltpu.VMEM((tq, D), jnp.float32),   # running numerator acc
            ],
        ),
        compiler_params=pltpu.CompilerParams(
            # BH axis sharded across TensorCores (balanced even for causal);
            # the block axis carries the KV reduction -> arbitrary.
            dimension_semantics=("parallel", "arbitrary"),
            vmem_limit_bytes=vmem_limit),
    )(*inputs)

    # auto_fp16(out_fp32=True): upcast the half-precision flash output to fp32
    # (fused by XLA with the un-fold transpose; numerically bf16-precision).
    out = out_flat[:, :T].reshape(B, H, T, D).transpose(0, 2, 1, 3)
    return out.astype(jnp.float32), None
    # TODO(synk): dropout (attention_dropout>0, training mode) not implemented;
    # module default is 0.0 / eval so forward semantics are unaffected.


def _reference(q, kv, softmax_scale=None, causal=False, key_padding_mask=None):
    B, T, H, D = q.shape
    scale = softmax_scale if softmax_scale is not None else 1.0 / math.sqrt(D)
    k = kv[:, :, 0].astype(jnp.float32)
    v = kv[:, :, 1].astype(jnp.float32)
    s = jnp.einsum('bthd,bshd->bhts', q.astype(jnp.float32), k) * scale
    if key_padding_mask is not None:
        s = jnp.where(key_padding_mask[:, None, None, :], s, -1e30)
    if causal:
        T_, S_ = s.shape[-2:]
        cm = jnp.tril(jnp.ones((T_, S_), bool))
        s = jnp.where(cm[None, None], s, -1e30)
    p = jax.nn.softmax(s, axis=-1)
    return jnp.einsum('bhts,bshd->bthd', p, v)


if __name__ == "__main__":
    B, T, S, H, D = 2, 128, 128, 2, 32
    key = jax.random.PRNGKey(0)
    kq, kkv, kq4, kkv4 = jax.random.split(key, 4)

    q = jax.random.normal(kq, (B, T, H, D), dtype=jnp.float32).astype(jnp.bfloat16)
    kv = jax.random.normal(kkv, (B, S, 2, H, D), dtype=jnp.float32).astype(jnp.bfloat16)

    # --- path 1: default usage (no mask, no causal), default large tiles ---
    out, attn = flash_attention(q, kv)
    out = jax.block_until_ready(out)
    assert out.shape == (B, T, H, D) and out.dtype == jnp.float32 and attn is None
    ref = _reference(q, kv)
    assert jnp.allclose(out, ref, rtol=3e-2, atol=3e-2), "mismatch (no mask)"

    # --- path 2: key_padding_mask, multi-block KV reduction (2x2 blocks) ---
    lens = jnp.array([S, S - 37], dtype=jnp.int32)
    kpm = jnp.arange(S)[None, :] < lens[:, None]          # (B, S) bool, True=keep
    out_m, _ = flash_attention(q, kv, key_padding_mask=kpm, tq=64, tk=64)
    out_m = jax.block_until_ready(out_m)
    ref_m = _reference(q, kv, key_padding_mask=kpm)
    assert jnp.allclose(out_m, ref_m, rtol=3e-2, atol=3e-2), "mismatch (mask)"

    # --- path 3: causal with DMA-level block skipping (4x4 -> 10 blocks) ---
    out_c, _ = flash_attention(q, kv, causal=True, tq=32, tk=32)
    out_c = jax.block_until_ready(out_c)
    ref_c = _reference(q, kv, causal=True)
    assert jnp.allclose(out_c, ref_c, rtol=3e-2, atol=3e-2), "mismatch (causal)"

    # --- path 4: non-aligned T/S exercises the padding + synthetic key mask ---
    T4, S4 = 100, 70
    q4 = jax.random.normal(kq4, (B, T4, H, D), dtype=jnp.float32).astype(jnp.bfloat16)
    kv4 = jax.random.normal(kkv4, (B, S4, 2, H, D), dtype=jnp.float32).astype(jnp.bfloat16)
    out_p, _ = flash_attention(q4, kv4)
    out_p = jax.block_until_ready(out_p)
    ref_p = _reference(q4, kv4)
    assert out_p.shape == (B, T4, H, D)
    assert jnp.allclose(out_p, ref_p, rtol=3e-2, atol=3e-2), "mismatch (padded)"

    print("KERNEL_OK")
</pallas_src>

<mosaic_0001>
module attributes {stable_mosaic.version = 11 : i64} {
  func.func @_flash_fwd_kernel(%arg0: i32, %arg1: i32, %arg2: memref<1xi32, #tpu.memory_space<smem>>, %arg3: memref<1xi32, #tpu.memory_space<smem>>, %arg4: memref<1x128x32xbf16, #tpu.memory_space<vmem>>, %arg5: memref<1x128x32xbf16, #tpu.memory_space<vmem>>, %arg6: memref<1x128x32xbf16, #tpu.memory_space<vmem>>, %arg7: memref<1x128x32xbf16, #tpu.memory_space<vmem>>, %arg8: memref<128x1xf32, #tpu.memory_space<vmem>>, %arg9: memref<128x1xf32, #tpu.memory_space<vmem>>, %arg10: memref<128x32xf32, #tpu.memory_space<vmem>>) attributes {dimension_semantics = [#tpu.dimension_semantics<parallel>, #tpu.dimension_semantics<arbitrary>], iteration_bounds = array<i64: 4, 1>, scalar_prefetch = 2 : i64, scratch_operands = 3 : i64, tpu.core_type = #tpu.core_type<tc>, window_params = [{transform_indices = @transform_0, window_bounds = array<i64: 1, 128, 32>}, {transform_indices = @transform_1, window_bounds = array<i64: 1, 128, 32>}, {transform_indices = @transform_2, window_bounds = array<i64: 1, 128, 32>}, {transform_indices = @transform_3, window_bounds = array<i64: 1, 128, 32>}]} {
    %0 = arith.index_cast %arg1 : i32 to index
    %1 = memref.load %arg3[%0] : memref<1xi32, #tpu.memory_space<smem>>
    %c0_i32 = arith.constant 0 : i32
    %2 = arith.cmpi eq, %1, %c0_i32 : i32
    %3 = arith.extui %2 : i1 to i32
    %c0_i32_0 = arith.constant 0 : i32
    %4 = arith.cmpi ne, %3, %c0_i32_0 : i32
    scf.if %4 {
      %cst_27 = arith.constant 0xFF800000 : f32
      %40 = vector.broadcast %cst_27 : f32 to vector<128x1xf32>
      %c0_28 = arith.constant 0 : index
      %c0_29 = arith.constant 0 : index
      %41 = vector.load %arg8[%c0_28, %c0_29] : memref<128x1xf32, #tpu.memory_space<vmem>>, vector<128x1xf32>
      tpu.vector_store %arg8[%c0_28, %c0_29], %40 {strides = array<i32>} : memref<128x1xf32, #tpu.memory_space<vmem>>, vector<128x1xf32>,
      %cst_30 = arith.constant 0.000000e+00 : f32
      %42 = vector.broadcast %cst_30 : f32 to vector<128x1xf32>
      %c0_31 = arith.constant 0 : index
      %c0_32 = arith.constant 0 : index
      %43 = vector.load %arg9[%c0_31, %c0_32] : memref<128x1xf32, #tpu.memory_space<vmem>>, vector<128x1xf32>
      tpu.vector_store %arg9[%c0_31, %c0_32], %42 {strides = array<i32>} : memref<128x1xf32, #tpu.memory_space<vmem>>, vector<128x1xf32>,
      %cst_33 = arith.constant 0.000000e+00 : f32
      %44 = vector.broadcast %cst_33 : f32 to vector<128x32xf32>
      %c0_34 = arith.constant 0 : index
      %c0_35 = arith.constant 0 : index
      %45 = vector.load %arg10[%c0_34, %c0_35] : memref<128x32xf32, #tpu.memory_space<vmem>>, vector<128x32xf32>
      tpu.vector_store %arg10[%c0_34, %c0_35], %44 {strides = array<i32>} : memref<128x32xf32, #tpu.memory_space<vmem>>, vector<128x32xf32>,
    } else {
    }
    %c0 = arith.constant 0 : index
    %c0_1 = arith.constant 0 : index
    %c0_2 = arith.constant 0 : index
    %5 = vector.load %arg4[%c0, %c0_1, %c0_2] : memref<1x128x32xbf16, #tpu.memory_space<vmem>>, vector<1x128x32xbf16>
    %6 = vector.shape_cast %5 : vector<1x128x32xbf16> to vector<128x32xbf16>
    %cst = arith.constant 1.767580e-01 : bf16
    %7 = vector.broadcast %cst : bf16 to vector<128x32xbf16>
    %8 = arith.mulf %6, %7 : vector<128x32xbf16>
    %c0_3 = arith.constant 0 : index
    %c0_4 = arith.constant 0 : index
    %c0_5 = arith.constant 0 : index
    %9 = vector.load %arg5[%c0_3, %c0_4, %c0_5] : memref<1x128x32xbf16, #tpu.memory_space<vmem>>, vector<1x128x32xbf16>
    %10 = vector.shape_cast %9 : vector<1x128x32xbf16> to vector<128x32xbf16>
    %c0_6 = arith.constant 0 : index
    %c0_7 = arith.constant 0 : index
    %c0_8 = arith.constant 0 : index
    %11 = vector.load %arg6[%c0_6, %c0_7, %c0_8] : memref<1x128x32xbf16, #tpu.memory_space<vmem>>, vector<1x128x32xbf16>
    %12 = vector.shape_cast %11 : vector<1x128x32xbf16> to vector<128x32xbf16>
    %cst_9 = arith.constant dense<0.000000e+00> : vector<128x128xf32>
    %13 = tpu.matmul %8, %10, %cst_9 {dimension_numbers = #tpu.dot_dimension_numbers<[1], [1], [0], [0], [0, 0, 1, 0], [], []>} : vector<128x32xbf16>, vector<128x32xbf16>, vector<128x128xf32> -> vector<128x128xf32>
    %c0_10 = arith.constant 0 : index
    %c0_11 = arith.constant 0 : index
    %14 = vector.load %arg8[%c0_10, %c0_11] : memref<128x1xf32, #tpu.memory_space<vmem>>, vector<128x1xf32>
    %cst_12 = arith.constant dense<0xFF800000> : vector<128xf32>
    %15 = vector.multi_reduction <maximumf>, %13, %cst_12 [1] : vector<128x128xf32> to vector<128xf32>
    %16 = vector.shape_cast %15 : vector<128xf32> to vector<128x1xf32>
    %17 = arith.maximumf %14, %16 : vector<128x1xf32>
    %18 = arith.subf %14, %17 : vector<128x1xf32>
    %19 = math.exp %18 : vector<128x1xf32>
    %20 = vector.broadcast %17 : vector<128x1xf32> to vector<128x128xf32>
    %21 = arith.subf %13, %20 : vector<128x128xf32>
    %22 = math.exp %21 : vector<128x128xf32>
    %c0_13 = arith.constant 0 : index
    %c0_14 = arith.constant 0 : index
    %23 = vector.load %arg9[%c0_13, %c0_14] : memref<128x1xf32, #tpu.memory_space<vmem>>, vector<128x1xf32>
    %24 = arith.mulf %19, %23 : vector<128x1xf32>
    %cst_15 = arith.constant dense<0.000000e+00> : vector<128xf32>
    %25 = vector.multi_reduction <add>, %22, %cst_15 [1] : vector<128x128xf32> to vector<128xf32>
    %26 = vector.shape_cast %25 : vector<128xf32> to vector<128x1xf32>
    %27 = arith.addf %24, %26 : vector<128x1xf32>
    %c0_16 = arith.constant 0 : index
    %c0_17 = arith.constant 0 : index
    %28 = vector.load %arg9[%c0_16, %c0_17] : memref<128x1xf32, #tpu.memory_space<vmem>>, vector<128x1xf32>
    tpu.vector_store %arg9[%c0_16, %c0_17], %27 {strides = array<i32>} : memref<128x1xf32, #tpu.memory_space<vmem>>, vector<128x1xf32>,
    %c0_18 = arith.constant 0 : index
    %c0_19 = arith.constant 0 : index
    %29 = vector.load %arg10[%c0_18, %c0_19] : memref<128x32xf32, #tpu.memory_space<vmem>>, vector<128x32xf32>
    %30 = vector.broadcast %19 : vector<128x1xf32> to vector<128x32xf32>
    %31 = arith.mulf %30, %29 : vector<128x32xf32>
    %32 = arith.truncf %22 : vector<128x128xf32> to vector<128x128xbf16>
    %cst_20 = arith.constant dense<0.000000e+00> : vector<128x32xf32>
    %33 = tpu.matmul %32, %12, %cst_20 {dimension_numbers = #tpu.dot_dimension_numbers<[1], [0], [0], [1], [0, 0, 1, 1], [], []>} : vector<128x128xbf16>, vector<128x32xbf16>, vector<128x32xf32> -> vector<128x32xf32>
    %34 = arith.addf %31, %33 : vector<128x32xf32>
    %c0_21 = arith.constant 0 : index
    %c0_22 = arith.constant 0 : index
    %35 = vector.load %arg10[%c0_21, %c0_22] : memref<128x32xf32, #tpu.memory_space<vmem>>, vector<128x32xf32>
    tpu.vector_store %arg10[%c0_21, %c0_22], %34 {strides = array<i32>} : memref<128x32xf32, #tpu.memory_space<vmem>>, vector<128x32xf32>,
    %c0_23 = arith.constant 0 : index
    %c0_24 = arith.constant 0 : index
    %36 = vector.load %arg8[%c0_23, %c0_24] : memref<128x1xf32, #tpu.memory_space<vmem>>, vector<128x1xf32>
    tpu.vector_store %arg8[%c0_23, %c0_24], %17 {strides = array<i32>} : memref<128x1xf32, #tpu.memory_space<vmem>>, vector<128x1xf32>,
    %c0_i32_25 = arith.constant 0 : i32
    %37 = arith.cmpi eq, %1, %c0_i32_25 : i32
    %38 = arith.extui %37 : i1 to i32
    %c0_i32_26 = arith.constant 0 : i32
    %39 = arith.cmpi ne, %38, %c0_i32_26 : i32
    scf.if %39 {
      %c0_27 = arith.constant 0 : index
      %c0_28 = arith.constant 0 : index
      %40 = vector.load %arg9[%c0_27, %c0_28] : memref<128x1xf32, #tpu.memory_space<vmem>>, vector<128x1xf32>
      %41 = tpu.reciprocal %40 {approx = true} : vector<128x1xf32> -> vector<128x1xf32>
      %c0_29 = arith.constant 0 : index
      %c0_30 = arith.constant 0 : index
      %42 = vector.load %arg10[%c0_29, %c0_30] : memref<128x32xf32, #tpu.memory_space<vmem>>, vector<128x32xf32>
      %43 = vector.broadcast %41 : vector<128x1xf32> to vector<128x32xf32>
      %44 = arith.mulf %42, %43 : vector<128x32xf32>
      %45 = arith.truncf %44 : vector<128x32xf32> to vector<128x32xbf16>
      %c0_31 = arith.constant 0 : index
      %c0_32 = arith.constant 0 : index
      %c0_33 = arith.constant 0 : index
      %46 = vector.load %arg7[%c0_31, %c0_32, %c0_33] : memref<1x128x32xbf16, #tpu.memory_space<vmem>>, vector<1x128x32xbf16>
      %47 = vector.shape_cast %46 : vector<1x128x32xbf16> to vector<128x32xbf16>
      %48 = vector.shape_cast %45 : vector<128x32xbf16> to vector<1x128x32xbf16>
      tpu.vector_store %arg7[%c0_31, %c0_32, %c0_33], %48 {strides = array<i32>} : memref<1x128x32xbf16, #tpu.memory_space<vmem>>, vector<1x128x32xbf16>,
    } else {
    }
    return
  }
  func.func @transform_0(%arg0: i32, %arg1: i32, %arg2: memref<1xi32, #tpu.memory_space<smem>>, %arg3: memref<1xi32, #tpu.memory_space<smem>>) -> (i32, i32, i32) {
    %0 = arith.index_cast %arg1 : i32 to index
    %1 = memref.load %arg2[%0] : memref<1xi32, #tpu.memory_space<smem>>
    %c0_i32 = arith.constant 0 : i32
    %c0_i32_0 = arith.constant 0 : i32
    return %arg0, %1, %c0_i32 : i32, i32, i32
  }
  func.func @transform_1(%arg0: i32, %arg1: i32, %arg2: memref<1xi32, #tpu.memory_space<smem>>, %arg3: memref<1xi32, #tpu.memory_space<smem>>) -> (i32, i32, i32) {
    %0 = arith.index_cast %arg1 : i32 to index
    %1 = memref.load %arg3[%0] : memref<1xi32, #tpu.memory_space<smem>>
    %c0_i32 = arith.constant 0 : i32
    %c0_i32_0 = arith.constant 0 : i32
    return %arg0, %1, %c0_i32 : i32, i32, i32
  }
  func.func @transform_2(%arg0: i32, %arg1: i32, %arg2: memref<1xi32, #tpu.memory_space<smem>>, %arg3: memref<1xi32, #tpu.memory_space<smem>>) -> (i32, i32, i32) {
    %0 = arith.index_cast %arg1 : i32 to index
    %1 = memref.load %arg3[%0] : memref<1xi32, #tpu.memory_space<smem>>
    %c0_i32 = arith.constant 0 : i32
    %c0_i32_0 = arith.constant 0 : i32
    return %arg0, %1, %c0_i32 : i32, i32, i32
  }
  func.func @transform_3(%arg0: i32, %arg1: i32, %arg2: memref<1xi32, #tpu.memory_space<smem>>, %arg3: memref<1xi32, #tpu.memory_space<smem>>) -> (i32, i32, i32) {
    %0 = arith.index_cast %arg1 : i32 to index
    %1 = memref.load %arg2[%0] : memref<1xi32, #tpu.memory_space<smem>>
    %c0_i32 = arith.constant 0 : i32
    %c0_i32_0 = arith.constant 0 : i32
    return %arg0, %1, %c0_i32 : i32, i32, i32
  }
}

</mosaic_0001>

<llo_original>
// kernel: tpu_custom_call.1
$region0: #{tpu_custom_call.1}
  #allocation0 [shape = 'u32[]', space=smem, size = 0x4, offset = 0x4, fixed_abs, tag = 'smem constant byte address 0x4 - core index']
  #allocation1 [shape = 'u32[144,128]{1,0:T(1,128)}', space=vmem, size = 0x12000, scoped, tag = 'internal scratch']
  #allocation2 [shape = 'f32[128,1]{1,0:T(8,128)}', space=vmem, size = 0x10000, scoped, tag = 'scratch operand']
  #allocation3 [shape = 'f32[128,1]{1,0:T(8,128)}', space=vmem, size = 0x10000, scoped, tag = 'scratch operand']
  #allocation4 [shape = 'f32[128,32]{1,0:T(8,128)}', space=vmem, size = 0x10000, scoped, tag = 'scratch operand']
  #allocation5 [shape = 's32[1]{0}', space=sflag, size = 0x4, scoped, tag = 'scoped memory for tpu_custom_call.1']
  #allocation6 [shape = 's32[1]{0:T(128)S(6)}', space=smem, size = 0x200, scoped, tag = 'prefetched SMEM operand 0']
  #allocation7 [shape = 's32[1]{0:T(128)S(6)}', space=smem, size = 0x200, scoped, tag = 'prefetched SMEM operand 1']
  %s0 = inlined_call_operand.<no memory space> [shape: s32[1], index: 0, kind: input, shape index: {}]
  %s1 = inlined_call_operand.<no memory space> [shape: s32[1], index: 1, kind: input, shape index: {}]
  %s2 = inlined_call_operand.vmem [shape: bf16[4,128,32], index: 2, kind: input, shape index: {}]
  %s3 = inlined_call_operand.vmem [shape: bf16[4,128,32], index: 3, kind: input, shape index: {}]
  %s4 = inlined_call_operand.vmem [shape: bf16[4,128,32], index: 4, kind: input, shape index: {}]
  %s5 = inlined_call_operand.vmem [shape: bf16[4,128,32], index: 5, kind: output, shape index: {}]
  %s6 = sld [smem:[#allocation0]]
  $region53: #{tpu_custom_call.1} parent=0
    _
  %s8 = ssub.s32 1, %s6
  %s9 = scalar_select 0, %s8, %s6
  %10 = sst [smem:[#allocation6]] %s0
  %11 = sst [smem:[#allocation7]] %s1
  loop: start=0, step=1, limit=6
  $region2: #{tpu_custom_call.1} parent=0 // loop_pre_header
    _
  $region3: #{tpu_custom_call.1} parent=0 // loop_header
    %s13 = sphi 0, %s17
    %p14 = scmp.ge.s32.totalorder %s13, 6
    %s20 = sphi 0, %s32
    %s21 = sphi 0, %s28
    %s22 = sphi 0, %s20
    %s23 = sphi 0, %s21
    %s24 = sphi 0, %s22
    %s25 = sphi 0, %s23
    %s39 = sphi 0, %s41
    %s42 = sphi 0, %s39
    %s43 = sphi 0, %s42
    %s59 = sphi 0, %s43
    %s69 = sphi 0, %s71
    %s72 = sphi 0, %s69
    %s73 = sphi 0, %s72
    %s89 = sphi 0, %s73
    %s99 = sphi 0, %s101
    %s102 = sphi 0, %s99
    %s103 = sphi 0, %s102
    %s119 = sphi 0, %s103
    %s129 = sphi 0, %s131
    %s132 = sphi 0, %s129
    %s133 = sphi 0, %s132
    %s149 = sphi 0, %s133
  $region4: #{tpu_custom_call.1} parent=0 // loop_header_branch
    %16 = sbr.rel (%p14) target = $region8
  $region5: #{tpu_custom_call.1} parent=0 // loop_body
    %s18 = ssub.s32 %s13, 1
    %s19 = ssub.s32 %s13, 2
    %s26 = sadd.s32 1, %s21
    %p27 = scmp.ge.s32.totalorder %s26, 1
    %s28 = scalar_select %p27, 0, %s26
    %s29 = sadd.s32 1, %s20
    %s30 = scalar_select %p27, %s29, %s20
    %p31 = scmp.ge.s32.totalorder %s30, 4
    %s32 = scalar_select %p31, 0, %s30
    %s33 = sld [smem:[#allocation6 + %s21]]
    %s34 = sld [smem:[#allocation6 + %s28]]
    %s35 = ssub.s32 %s20, %s32
    %s36 = ssub.s32 %s33, %s34
    %s37 = sor.u32 %s35, %s36
    %p38 = scmp.eq.s32.totalorder %s37, 0
    %s40 = sadd.s32 %s39, 1
    %s41 = scalar_select %p38, %s39, %s40
    %p44 = pneg %p38
    %p45 = scmp.eq.s32.totalorder %s13, 3
    %p46 = por %p44, %p45
    %p47 = scmp.ne.s32.totalorder %s39, %s42
    %p48 = scmp.eq.s32.totalorder %s13, 0
    %p49 = por %p47, %p48
    %p50 = scmp.ne.s32.totalorder %s39, %s42
    %p51 = scmp.eq.s32.totalorder %s18, 3
    %p52 = por %p50, %p51
    %p53 = scmp.ne.s32.totalorder %s42, %s43
    %p54 = scmp.eq.s32.totalorder %s18, 0
    %p55 = por %p53, %p54
    %p56 = scmp.ne.s32.totalorder %s42, %s43
    %p57 = scmp.eq.s32.totalorder %s19, 3
    %p58 = por %p56, %p57
    %p60 = scmp.ne.s32.totalorder %s43, %s59
    %p61 = scmp.eq.s32.totalorder %s19, 0
    %p62 = por %p60, %p61
    %s63 = sld [smem:[#allocation7 + %s21]]
    %s64 = sld [smem:[#allocation7 + %s28]]
    %s65 = ssub.s32 %s20, %s32
    %s66 = ssub.s32 %s63, %s64
    %s67 = sor.u32 %s65, %s66
    %p68 = scmp.eq.s32.totalorder %s67, 0
    %s70 = sadd.s32 %s69, 1
    %s71 = scalar_select %p68, %s69, %s70
    %p74 = pneg %p68
    %p75 = scmp.eq.s32.totalorder %s13, 3
    %p76 = por %p74, %p75
    %p77 = scmp.ne.s32.totalorder %s69, %s72
    %p78 = scmp.eq.s32.totalorder %s13, 0
    %p79 = por %p77, %p78
    %p80 = scmp.ne.s32.totalorder %s69, %s72
    %p81 = scmp.eq.s32.totalorder %s18, 3
    %p82 = por %p80, %p81
    %p83 = scmp.ne.s32.totalorder %s72, %s73
    %p84 = scmp.eq.s32.totalorder %s18, 0
    %p85 = por %p83, %p84
    %p86 = scmp.ne.s32.totalorder %s72, %s73
    %p87 = scmp.eq.s32.totalorder %s19, 3
    %p88 = por %p86, %p87
    %p90 = scmp.ne.s32.totalorder %s73, %s89
    %p91 = scmp.eq.s32.totalorder %s19, 0
    %p92 = por %p90, %p91
    %s93 = sld [smem:[#allocation7 + %s21]]
    %s94 = sld [smem:[#allocation7 + %s28]]
    %s95 = ssub.s32 %s20, %s32
    %s96 = ssub.s32 %s93, %s94
    %s97 = sor.u32 %s95, %s96
    %p98 = scmp.eq.s32.totalorder %s97, 0
    %s100 = sadd.s32 %s99, 1
    %s101 = scalar_select %p98, %s99, %s100
    %p104 = pneg %p98
    %p105 = scmp.eq.s32.totalorder %s13, 3
    %p106 = por %p104, %p105
    %p107 = scmp.ne.s32.totalorder %s99, %s102
    %p108 = scmp.eq.s32.totalorder %s13, 0
    %p109 = por %p107, %p108
    %p110 = scmp.ne.s32.totalorder %s99, %s102
    %p111 = scmp.eq.s32.totalorder %s18, 3
    %p112 = por %p110, %p111
    %p113 = scmp.ne.s32.totalorder %s102, %s103
    %p114 = scmp.eq.s32.totalorder %s18, 0
    %p115 = por %p113, %p114
    %p116 = scmp.ne.s32.totalorder %s102, %s103
    %p117 = scmp.eq.s32.totalorder %s19, 3
    %p118 = por %p116, %p117
    %p120 = scmp.ne.s32.totalorder %s103, %s119
    %p121 = scmp.eq.s32.totalorder %s19, 0
    %p122 = por %p120, %p121
    %s123 = sld [smem:[#allocation6 + %s21]]
    %s124 = sld [smem:[#allocation6 + %s28]]
    %s125 = ssub.s32 %s20, %s32
    %s126 = ssub.s32 %s123, %s124
    %s127 = sor.u32 %s125, %s126
    %p128 = scmp.eq.s32.totalorder %s127, 0
    %s130 = sadd.s32 %s129, 1
    %s131 = scalar_select %p128, %s129, %s130
    %p134 = pneg %p128
    %p135 = scmp.eq.s32.totalorder %s13, 3
    %p136 = por %p134, %p135
    %p137 = scmp.ne.s32.totalorder %s129, %s132
    %p138 = scmp.eq.s32.totalorder %s13, 0
    %p139 = por %p137, %p138
    %p140 = scmp.ne.s32.totalorder %s129, %s132
    %p141 = scmp.eq.s32.totalorder %s18, 3
    %p142 = por %p140, %p141
    %p143 = scmp.ne.s32.totalorder %s132, %s133
    %p144 = scmp.eq.s32.totalorder %s18, 0
    %p145 = por %p143, %p144
    %p146 = scmp.ne.s32.totalorder %s132, %s133
    %p147 = scmp.eq.s32.totalorder %s19, 3
    %p148 = por %p146, %p147
    %p150 = scmp.ne.s32.totalorder %s133, %s149
    %p151 = scmp.eq.s32.totalorder %s19, 0
    %p152 = por %p150, %p151
    %p153 = scmp.le.s32.totalorder 1, %s13
    %p154 = scmp.lt.s32.totalorder %s13, 5
    %p155 = pnand %p153, %p154
    %p156 = pneg %p155
    // Predicated region
    $region9: #{tpu_custom_call.1} parent=5 // pred_check
      _
    $region10: #{tpu_custom_call.1} parent=5 // pred_check_branch
      %158 = sbr.rel (%p155) target = $region12
    $region11: #{tpu_custom_call.1} parent=5 // pred_region
      %s159 = ssub.s32 %s13, 1
    $region12: #{tpu_custom_call.1} parent=5 // pred_fallthru
      _
    %p160 = scmp.lt.s32.totalorder %s13, 4
    // Predicated region
    $region13: #{tpu_custom_call.1} parent=5 // pred_check
      %p161 = pneg %p160
    $region14: #{tpu_custom_call.1} parent=5 // pred_check_branch
      %163 = sbr.rel (%p161) target = $region16
    $region15: #{tpu_custom_call.1} parent=5 // pred_region
      // Predicated region
      $region17: #{tpu_custom_call.1} parent=15 // pred_check
        %p164 = pneg %p49
      $region18: #{tpu_custom_call.1} parent=15 // pred_check_branch
        %166 = sbr.rel (%p164) target = $region20
      $region19: #{tpu_custom_call.1} parent=15 // pred_region
        %s167 = sld [smem:[#allocation6 + %s21]]
        %s168 = smul.u32 16, %s167
        %p169 = scmp.lt.s32.totalorder %s20, 3
        %s170 = scalar_select %p169, %s20, 3
        %p171 = scmp.lt.s32.totalorder %s168, 15
        %s172 = scalar_select %p171, %s168, 15
        %s173 = smul.addr %s170, 16
        %s174 = sadd.s32 %s172, %s173
        %s175 = smul.addr %s174, 4
        %s176 = scalar_lea.vmem %s2, %s175
        %s177 = sld [smem:[#allocation6 + %s21]]
        %s178 = smul.u32 16, %s177
      $region20: #{tpu_custom_call.1} parent=15 // pred_fallthru
        _
      // Predicated region
      $region21: #{tpu_custom_call.1} parent=15 // pred_check
        %p179 = pneg %p79
      $region22: #{tpu_custom_call.1} parent=15 // pred_check_branch
        %181 = sbr.rel (%p179) target = $region24
      $region23: #{tpu_custom_call.1} parent=15 // pred_region
        %s182 = sld [smem:[#allocation7 + %s21]]
        %s183 = smul.u32 16, %s182
        %p184 = scmp.lt.s32.totalorder %s20, 3
        %s185 = scalar_select %p184, %s20, 3
        %p186 = scmp.lt.s32.totalorder %s183, 15
        %s187 = scalar_select %p186, %s183, 15
        %s188 = smul.addr %s185, 16
        %s189 = sadd.s32 %s187, %s188
        %s190 = smul.addr %s189, 4
        %s191 = scalar_lea.vmem %s3, %s190
        %s192 = sld [smem:[#allocation7 + %s21]]
        %s193 = smul.u32 16, %s192
      $region24: #{tpu_custom_call.1} parent=15 // pred_fallthru
        _
      // Predicated region
      $region25: #{tpu_custom_call.1} parent=15 // pred_check
        %p194 = pneg %p109
      $region26: #{tpu_custom_call.1} parent=15 // pred_check_branch
        %196 = sbr.rel (%p194) target = $region28
      $region27: #{tpu_custom_call.1} parent=15 // pred_region
        %s197 = sld [smem:[#allocation7 + %s21]]
        %s198 = smul.u32 16, %s197
        %p199 = scmp.lt.s32.totalorder %s20, 3
        %s200 = scalar_select %p199, %s20, 3
        %p201 = scmp.lt.s32.totalorder %s198, 15
        %s202 = scalar_select %p201, %s198, 15
        %s203 = smul.addr %s200, 16
        %s204 = sadd.s32 %s202, %s203
        %s205 = smul.addr %s204, 4
        %s206 = scalar_lea.vmem %s4, %s205
        %s207 = sld [smem:[#allocation7 + %s21]]
        %s208 = smul.u32 16, %s207
      $region28: #{tpu_custom_call.1} parent=15 // pred_fallthru
        _
    $region16: #{tpu_custom_call.1} parent=5 // pred_fallthru
      _
    %p209 = scmp.le.s32.totalorder 1, %s13
    %p210 = scmp.lt.s32.totalorder %s13, 5
    %p211 = pnand %p209, %p210
    %p212 = pneg %p211
    // Predicated region
    $region29: #{tpu_custom_call.1} parent=5 // pred_check
      _
    $region30: #{tpu_custom_call.1} parent=5 // pred_check_branch
      %214 = sbr.rel (%p211) target = $region32
    $region31: #{tpu_custom_call.1} parent=5 // pred_region
      %s215 = ssub.s32 %s13, 1
      %s216 = sld [smem:[#allocation6 + %s23]]
      %s217 = smul.u32 16, %s216
      %p218 = scmp.lt.s32.totalorder %s22, 3
      %s219 = scalar_select %p218, %s22, 3
      %p220 = scmp.lt.s32.totalorder %s217, 15
      %s221 = scalar_select %p220, %s217, 15
      %s222 = smul.addr %s219, 16
      %s223 = sadd.s32 %s221, %s222
      %s224 = smul.addr %s223, 4
      %s225 = scalar_lea.vmem %s2, %s224
      %p226 = pneg %p55
      %p227 = pneg %p52
      %s228 = sld [smem:[#allocation7 + %s23]]
      %s229 = smul.u32 16, %s228
      %p230 = scmp.lt.s32.totalorder %s22, 3
      %s231 = scalar_select %p230, %s22, 3
      %p232 = scmp.lt.s32.totalorder %s229, 15
      %s233 = scalar_select %p232, %s229, 15
      %s234 = smul.addr %s231, 16
      %s235 = sadd.s32 %s233, %s234
      %s236 = smul.addr %s235, 4
      %s237 = scalar_lea.vmem %s3, %s236
      %p238 = pneg %p85
      %p239 = pneg %p82
      %s240 = sld [smem:[#allocation7 + %s23]]
      %s241 = smul.u32 16, %s240
      %p242 = scmp.lt.s32.totalorder %s22, 3
      %s243 = scalar_select %p242, %s22, 3
      %p244 = scmp.lt.s32.totalorder %s241, 15
      %s245 = scalar_select %p244, %s241, 15
      %s246 = smul.addr %s243, 16
      %s247 = sadd.s32 %s245, %s246
      %s248 = smul.addr %s247, 4
      %s249 = scalar_lea.vmem %s4, %s248
      %p250 = pneg %p115
      %p251 = pneg %p112
      %p252 = pneg %p145
      %p253 = pneg %p142
      %s254 = sld [smem:[#allocation6 + %s23]]
      %s255 = smul.u32 16, %s254
      %p256 = scmp.lt.s32.totalorder %s22, 3
      %s257 = scalar_select %p256, %s22, 3
      %p258 = scmp.lt.s32.totalorder %s255, 15
      %s259 = scalar_select %p258, %s255, 15
      %s260 = smul.addr %s257, 16
      %s261 = sadd.s32 %s259, %s260
      %s262 = smul.addr %s261, 4
      %s263 = scalar_lea.vmem %s5, %s262
      %s264 = sld [smem:[#allocation6 + %s23]]
      %s265 = smul.u32 16, %s264
      %p266 = scmp.lt.s32.totalorder %s22, 3
      %s267 = scalar_select %p266, %s22, 3
      %p268 = scmp.lt.s32.totalorder %s265, 15
      %s269 = scalar_select %p268, %s265, 15
      %s270 = smul.addr %s267, 16
      %s271 = sadd.s32 %s269, %s270
      %s272 = smul.addr %s271, 4
      %s273 = scalar_lea.vmem %s2, %s272
      %s274 = sld [smem:[#allocation6 + %s23]]
      %s275 = smul.u32 16, %s274
      %s276 = sld [smem:[#allocation7 + %s23]]
      %s277 = smul.u32 16, %s276
      %p278 = scmp.lt.s32.totalorder %s22, 3
      %s279 = scalar_select %p278, %s22, 3
      %p280 = scmp.lt.s32.totalorder %s277, 15
      %s281 = scalar_select %p280, %s277, 15
      %s282 = smul.addr %s279, 16
      %s283 = sadd.s32 %s281, %s282
      %s284 = smul.addr %s283, 4
      %s285 = scalar_lea.vmem %s3, %s284
      %s286 = sld [smem:[#allocation7 + %s23]]
      %s287 = smul.u32 16, %s286
      %s288 = sld [smem:[#allocation7 + %s23]]
      %s289 = smul.u32 16, %s288
      %p290 = scmp.lt.s32.totalorder %s22, 3
      %s291 = scalar_select %p290, %s22, 3
      %p292 = scmp.lt.s32.totalorder %s289, 15
      %s293 = scalar_select %p292, %s289, 15
      %s294 = smul.addr %s291, 16
      %s295 = sadd.s32 %s293, %s294
      %s296 = smul.addr %s295, 4
      %s297 = scalar_lea.vmem %s4, %s296
      %s298 = sld [smem:[#allocation7 + %s23]]
      %s299 = smul.u32 16, %s298
      %s300 = sld [smem:[#allocation6 + %s23]]
      %s301 = smul.u32 16, %s300
      %p302 = scmp.lt.s32.totalorder %s22, 3
      %s303 = scalar_select %p302, %s22, 3
      %p304 = scmp.lt.s32.totalorder %s301, 15
      %s305 = scalar_select %p304, %s301, 15
      %s306 = smul.addr %s303, 16
      %s307 = sadd.s32 %s305, %s306
      %s308 = smul.addr %s307, 4
      %s309 = scalar_lea.vmem %s5, %s308
      %s310 = sld [smem:[#allocation6 + %s23]]
      %s311 = smul.u32 16, %s310
      %s314 = sld [smem:[#allocation7 + %s23]]
      %p315 = scmp.eq.s32.totalorder %s314, 0
      // Predicated region
      $region33: #{tpu_custom_call.1} parent=31 // pred_check
        %p316 = pneg %p315
      $region34: #{tpu_custom_call.1} parent=31 // pred_check_branch
        %318 = sbr.rel (%p316) target = $region36
      $region35: #{tpu_custom_call.1} parent=31 // pred_region
        %vm319 = vcmask 7168
        %320 = vst.msk [vmem:[#allocation2] sm:$0xff] %vm319, -inf
        %321 = vst.msk [vmem:[#allocation2 + $0x8] sm:$0xff] %vm319, -inf
        %322 = vst.msk [vmem:[#allocation2 + $0x10] sm:$0xff] %vm319, -inf
        %323 = vst.msk [vmem:[#allocation2 + $0x18] sm:$0xff] %vm319, -inf
        %324 = vst.msk [vmem:[#allocation2 + $0x20] sm:$0xff] %vm319, -inf
        %325 = vst.msk [vmem:[#allocation2 + $0x28] sm:$0xff] %vm319, -inf
        %326 = vst.msk [vmem:[#allocation2 + $0x30] sm:$0xff] %vm319, -inf
        %327 = vst.msk [vmem:[#allocation2 + $0x38] sm:$0xff] %vm319, -inf
        %328 = vst.msk [vmem:[#allocation2 + $0x40] sm:$0xff] %vm319, -inf
        %329 = vst.msk [vmem:[#allocation2 + $0x48] sm:$0xff] %vm319, -inf
        %330 = vst.msk [vmem:[#allocation2 + $0x50] sm:$0xff] %vm319, -inf
        %331 = vst.msk [vmem:[#allocation2 + $0x58] sm:$0xff] %vm319, -inf
        %332 = vst.msk [vmem:[#allocation2 + $0x60] sm:$0xff] %vm319, -inf
        %333 = vst.msk [vmem:[#allocation2 + $0x68] sm:$0xff] %vm319, -inf
        %334 = vst.msk [vmem:[#allocation2 + $0x70] sm:$0xff] %vm319, -inf
        %335 = vst.msk [vmem:[#allocation2 + $0x78] sm:$0xff] %vm319, -inf
        %336 = vst.msk [vmem:[#allocation3] sm:$0xff] %vm319, 0.0
        %337 = vst.msk [vmem:[#allocation3 + $0x8] sm:$0xff] %vm319, 0.0
        %338 = vst.msk [vmem:[#allocation3 + $0x10] sm:$0xff] %vm319, 0.0
        %339 = vst.msk [vmem:[#allocation3 + $0x18] sm:$0xff] %vm319, 0.0
        %340 = vst.msk [vmem:[#allocation3 + $0x20] sm:$0xff] %vm319, 0.0
        %341 = vst.msk [vmem:[#allocation3 + $0x28] sm:$0xff] %vm319, 0.0
        %342 = vst.msk [vmem:[#allocation3 + $0x30] sm:$0xff] %vm319, 0.0
        %343 = vst.msk [vmem:[#allocation3 + $0x38] sm:$0xff] %vm319, 0.0
        %344 = vst.msk [vmem:[#allocation3 + $0x40] sm:$0xff] %vm319, 0.0
        %345 = vst.msk [vmem:[#allocation3 + $0x48] sm:$0xff] %vm319, 0.0
        %346 = vst.msk [vmem:[#allocation3 + $0x50] sm:$0xff] %vm319, 0.0
        %347 = vst.msk [vmem:[#allocation3 + $0x58] sm:$0xff] %vm319, 0.0
        %348 = vst.msk [vmem:[#allocation3 + $0x60] sm:$0xff] %vm319, 0.0
        %349 = vst.msk [vmem:[#allocation3 + $0x68] sm:$0xff] %vm319, 0.0
        %350 = vst.msk [vmem:[#allocation3 + $0x70] sm:$0xff] %vm319, 0.0
        %351 = vst.msk [vmem:[#allocation3 + $0x78] sm:$0xff] %vm319, 0.0
        %vm352 = vcmask 261120
        %353 = vst.msk [vmem:[#allocation4] sm:$0xff] %vm352, 0.0
        %354 = vst.msk [vmem:[#allocation4 + $0x8] sm:$0xff] %vm352, 0.0
        %355 = vst.msk [vmem:[#allocation4 + $0x10] sm:$0xff] %vm352, 0.0
        %356 = vst.msk [vmem:[#allocation4 + $0x18] sm:$0xff] %vm352, 0.0
        %357 = vst.msk [vmem:[#allocation4 + $0x20] sm:$0xff] %vm352, 0.0
        %358 = vst.msk [vmem:[#allocation4 + $0x28] sm:$0xff] %vm352, 0.0
        %359 = vst.msk [vmem:[#allocation4 + $0x30] sm:$0xff] %vm352, 0.0
        %360 = vst.msk [vmem:[#allocation4 + $0x38] sm:$0xff] %vm352, 0.0
        %361 = vst.msk [vmem:[#allocation4 + $0x40] sm:$0xff] %vm352, 0.0
        %362 = vst.msk [vmem:[#allocation4 + $0x48] sm:$0xff] %vm352, 0.0
        %363 = vst.msk [vmem:[#allocation4 + $0x50] sm:$0xff] %vm352, 0.0
        %364 = vst.msk [vmem:[#allocation4 + $0x58] sm:$0xff] %vm352, 0.0
        %365 = vst.msk [vmem:[#allocation4 + $0x60] sm:$0xff] %vm352, 0.0
        %366 = vst.msk [vmem:[#allocation4 + $0x68] sm:$0xff] %vm352, 0.0
        %367 = vst.msk [vmem:[#allocation4 + $0x70] sm:$0xff] %vm352, 0.0
        %368 = vst.msk [vmem:[#allocation4 + $0x78] sm:$0xff] %vm352, 0.0
      $region36: #{tpu_custom_call.1} parent=31 // pred_fallthru
        _
      %v369 = vld [vmem:[%s273] sm:$0xf]
      %v370 = vld [vmem:[%s273 + $0x4] sm:$0xf]
      %v371 = vld [vmem:[%s273 + $0x8] sm:$0xf]
      %v372 = vld [vmem:[%s273 + $0xc] sm:$0xf]
      %v373 = vld [vmem:[%s273 + $0x10] sm:$0xf]
      %v374 = vld [vmem:[%s273 + $0x14] sm:$0xf]
      %v375 = vld [vmem:[%s273 + $0x18] sm:$0xf]
      %v376 = vld [vmem:[%s273 + $0x1c] sm:$0xf]
      %v377 = vld [vmem:[%s273 + $0x20] sm:$0xf]
      %v378 = vld [vmem:[%s273 + $0x24] sm:$0xf]
      %v379 = vld [vmem:[%s273 + $0x28] sm:$0xf]
      %v380 = vld [vmem:[%s273 + $0x2c] sm:$0xf]
      %v381 = vld [vmem:[%s273 + $0x30] sm:$0xf]
      %v382 = vld [vmem:[%s273 + $0x34] sm:$0xf]
      %v383 = vld [vmem:[%s273 + $0x38] sm:$0xf]
      %v384 = vld [vmem:[%s273 + $0x3c] sm:$0xf]
      %v385 = vmul.bf16 %v369, 1043676725
      %v386 = vmul.bf16 %v370, 1043676725
      %v387 = vmul.bf16 %v371, 1043676725
      %v388 = vmul.bf16 %v372, 1043676725
      %v389 = vmul.bf16 %v373, 1043676725
      %v390 = vmul.bf16 %v374, 1043676725
      %v391 = vmul.bf16 %v375, 1043676725
      %v392 = vmul.bf16 %v376, 1043676725
      %v393 = vmul.bf16 %v377, 1043676725
      %v394 = vmul.bf16 %v378, 1043676725
      %v395 = vmul.bf16 %v379, 1043676725
      %v396 = vmul.bf16 %v380, 1043676725
      %v397 = vmul.bf16 %v381, 1043676725
      %v398 = vmul.bf16 %v382, 1043676725
      %v399 = vmul.bf16 %v383, 1043676725
      %v400 = vmul.bf16 %v384, 1043676725
      %v401 = vld [vmem:[%s285] sm:$0xf]
      %v402 = vld [vmem:[%s285 + $0x4] sm:$0xf]
      %v403 = vld [vmem:[%s285 + $0x8] sm:$0xf]
      %v404 = vld [vmem:[%s285 + $0xc] sm:$0xf]
      %v405 = vld [vmem:[%s285 + $0x10] sm:$0xf]
      %v406 = vld [vmem:[%s285 + $0x14] sm:$0xf]
      %v407 = vld [vmem:[%s285 + $0x18] sm:$0xf]
      %v408 = vld [vmem:[%s285 + $0x1c] sm:$0xf]
      %v409 = vld [vmem:[%s285 + $0x20] sm:$0xf]
      %v410 = vld [vmem:[%s285 + $0x24] sm:$0xf]
      %v411 = vld [vmem:[%s285 + $0x28] sm:$0xf]
      %v412 = vld [vmem:[%s285 + $0x2c] sm:$0xf]
      %v413 = vld [vmem:[%s285 + $0x30] sm:$0xf]
      %v414 = vld [vmem:[%s285 + $0x34] sm:$0xf]
      %v415 = vld [vmem:[%s285 + $0x38] sm:$0xf]
      %v416 = vld [vmem:[%s285 + $0x3c] sm:$0xf]
      %v417 = vld [vmem:[%s297] sm:$0xf]
      %v418 = vld [vmem:[%s297 + $0x4] sm:$0xf]
      %v419 = vld [vmem:[%s297 + $0x8] sm:$0xf]
      %v420 = vld [vmem:[%s297 + $0xc] sm:$0xf]
      %v421 = vld [vmem:[%s297 + $0x10] sm:$0xf]
      %v422 = vld [vmem:[%s297 + $0x14] sm:$0xf]
      %v423 = vld [vmem:[%s297 + $0x18] sm:$0xf]
      %v424 = vld [vmem:[%s297 + $0x1c] sm:$0xf]
      %v425 = vld [vmem:[%s297 + $0x20] sm:$0xf]
      %v426 = vld [vmem:[%s297 + $0x24] sm:$0xf]
      %v427 = vld [vmem:[%s297 + $0x28] sm:$0xf]
      %v428 = vld [vmem:[%s297 + $0x2c] sm:$0xf]
      %v429 = vld [vmem:[%s297 + $0x30] sm:$0xf]
      %v430 = vld [vmem:[%s297 + $0x34] sm:$0xf]
      %v431 = vld [vmem:[%s297 + $0x38] sm:$0xf]
      %v432 = vld [vmem:[%s297 + $0x3c] sm:$0xf]
      %v449 = vunpack.c.l.b16 %v385
      %v450 = vunpack.c.l.b16 %v386
      %v451 = vunpack.c.l.b16 %v387
      %v452 = vunpack.c.l.b16 %v388
      %v453 = vunpack.c.l.b16 %v389
      %v454 = vunpack.c.l.b16 %v390
      %v455 = vunpack.c.l.b16 %v391
      %v456 = vunpack.c.l.b16 %v392
      %v457 = vunpack.c.l.b16 %v393
      %v458 = vunpack.c.l.b16 %v394
      %v459 = vunpack.c.l.b16 %v395
      %v460 = vunpack.c.l.b16 %v396
      %v461 = vunpack.c.l.b16 %v397
      %v462 = vunpack.c.l.b16 %v398
      %v463 = vunpack.c.l.b16 %v399
      %v464 = vunpack.c.l.b16 %v400
      %v465 = vpack.c.b16 %v450, %v449
      %v466 = vpack.c.b16 %v452, %v451
      %v467 = vpack.c.b16 %v454, %v453
      %v468 = vpack.c.b16 %v456, %v455
      %v469 = vpack.c.b16 %v458, %v457
      %v470 = vpack.c.b16 %v460, %v459
      %v471 = vpack.c.b16 %v462, %v461
      %v472 = vpack.c.b16 %v464, %v463
      %v489 = vunpack.c.l.b16 %v401
      %v490 = vunpack.c.l.b16 %v402
      %v491 = vunpack.c.l.b16 %v403
      %v492 = vunpack.c.l.b16 %v404
      %v493 = vunpack.c.l.b16 %v405
      %v494 = vunpack.c.l.b16 %v406
      %v495 = vunpack.c.l.b16 %v407
      %v496 = vunpack.c.l.b16 %v408
      %v497 = vunpack.c.l.b16 %v409
      %v498 = vunpack.c.l.b16 %v410
      %v499 = vunpack.c.l.b16 %v411
      %v500 = vunpack.c.l.b16 %v412
      %v501 = vunpack.c.l.b16 %v413
      %v502 = vunpack.c.l.b16 %v414
      %v503 = vunpack.c.l.b16 %v415
      %v504 = vunpack.c.l.b16 %v416
      %v505 = vpack.c.b16 %v490, %v489
      %v506 = vpack.c.b16 %v492, %v491
      %v507 = vpack.c.b16 %v494, %v493
      %v508 = vpack.c.b16 %v496, %v495
      %v509 = vpack.c.b16 %v498, %v497
      %v510 = vpack.c.b16 %v500, %v499
      %v511 = vpack.c.b16 %v502, %v501
      %v512 = vpack.c.b16 %v504, %v503
      %vm513 = vcmask 261120
      %v515 = vsel %vm513, %v465, 0
      %v518 = vsel %vm513, %v466, 0
      %v521 = vsel %vm513, %v467, 0
      %v524 = vsel %vm513, %v468, 0
      %v527 = vsel %vm513, %v469, 0
      %v530 = vsel %vm513, %v470, 0
      %v533 = vsel %vm513, %v471, 0
      %v536 = vsel %vm513, %v472, 0
      %v539 = vsel %vm513, %v505, 0
      %v542 = vsel %vm513, %v506, 0
      %v545 = vsel %vm513, %v507, 0
      %v548 = vsel %vm513, %v508, 0
      %v551 = vsel %vm513, %v509, 0
      %v554 = vsel %vm513, %v510, 0
      %v557 = vsel %vm513, %v511, 0
      %v560 = vsel %vm513, %v512, 0
      %562 = vmatprep.subr.bf16.mxu0 0
      %563 = vmatpush1.bf16.xpose.msra.mxu0 %v539
      %564 = vmatprep.subr.bf16.mxu0 0
      %565 = vmatpush1.bf16.xpose.msra.mxu0 %v542
      %566 = vmatprep.subr.bf16.mxu0 0
      %567 = vmatpush1.bf16.xpose.msra.mxu0 %v545
      %568 = vmatprep.subr.bf16.mxu0 0
      %569 = vmatpush1.bf16.xpose.msra.mxu0 %v548
      %570 = vmatprep.subr.bf16.mxu0 0
      %571 = vmatpush1.bf16.xpose.msra.mxu0 %v551
      %572 = vmatprep.subr.bf16.mxu0 0
      %573 = vmatpush1.bf16.xpose.msra.mxu0 %v554
      %574 = vmatprep.subr.bf16.mxu0 0
      %575 = vmatpush1.bf16.xpose.msra.mxu0 %v557
      %576 = vmatprep.subr.bf16.mxu0 0
      %577 = vmatpush1.bf16.xpose.msra.mxu0 %v560
      %578 = vmatprep.subr.bf16.mxu0 0
      %579 = vmatpush1.bf16.xpose.msra.mxu0 0
      %580 = vmatprep.subr.bf16.mxu0 0
      %581 = vmatpush1.bf16.xpose.msra.mxu0 0
      %582 = vmatprep.subr.bf16.mxu0 0
      %583 = vmatpush1.bf16.xpose.msra.mxu0 0
      %584 = vmatprep.subr.bf16.mxu0 0
      %585 = vmatpush1.bf16.xpose.msra.mxu0 0
      %586 = vmatprep.subr.bf16.mxu0 0
      %587 = vmatpush1.bf16.xpose.msra.mxu0 0
      %588 = vmatprep.subr.bf16.mxu0 0
      %589 = vmatpush1.bf16.xpose.msra.mxu0 0
      %590 = vmatprep.subr.bf16.mxu0 0
      %591 = vmatpush1.bf16.xpose.msra.mxu0 0
      %592 = vmatprep.subr.bf16.mxu0 0
      %593 = vmatpush1.bf16.xpose.msra.mxu0 0
      %594 = vmatprep.mubr.bf16.mxu0 0
      %595 = vmatmul.mubr.bf16.gmra.mrb[0].mxu0 %v515
      %v596 = vpop.f32.mrb[0].mxu0
      %v597 = vadd.f32 0.0, %v596
      %v598 = vpop.f32.mrb[0].mxu0
      %v599 = vpop.f32.mrb[0].mxu0
      %v600 = vadd.f32 0.0, %v599
      %v601 = vpop.f32.mrb[0].mxu0
      %602 = vmatprep.mubr.bf16.mxu0 0
      %603 = vmatmul.mubr.bf16.gmra.mrb[0].mxu0 %v518
      %v604 = vpop.f32.mrb[0].mxu0
      %v605 = vadd.f32 0.0, %v604
      %v606 = vpop.f32.mrb[0].mxu0
      %v607 = vpop.f32.mrb[0].mxu0
      %v608 = vadd.f32 0.0, %v607
      %v609 = vpop.f32.mrb[0].mxu0
      %610 = vmatprep.mubr.bf16.mxu0 0
      %611 = vmatmul.mubr.bf16.gmra.mrb[0].mxu0 %v521
      %v612 = vpop.f32.mrb[0].mxu0
      %v613 = vadd.f32 0.0, %v612
      %v614 = vpop.f32.mrb[0].mxu0
      %v615 = vpop.f32.mrb[0].mxu0
      %v616 = vadd.f32 0.0, %v615
      %v617 = vpop.f32.mrb[0].mxu0
      %618 = vmatprep.mubr.bf16.mxu0 0
      %619 = vmatmul.mubr.bf16.gmra.mrb[0].mxu0 %v524
      %v620 = vpop.f32.mrb[0].mxu0
      %v621 = vadd.f32 0.0, %v620
      %v622 = vpop.f32.mrb[0].mxu0
      %v623 = vpop.f32.mrb[0].mxu0
      %v624 = vadd.f32 0.0, %v623
      %v625 = vpop.f32.mrb[0].mxu0
      %626 = vmatprep.mubr.bf16.mxu0 0
      %627 = vmatmul.mubr.bf16.gmra.mrb[0].mxu0 %v527
      %v628 = vpop.f32.mrb[0].mxu0
      %v629 = vadd.f32 0.0, %v628
      %v630 = vpop.f32.mrb[0].mxu0
      %v631 = vpop.f32.mrb[0].mxu0
      %v632 = vadd.f32 0.0, %v631
      %v633 = vpop.f32.mrb[0].mxu0
      %634 = vmatprep.mubr.bf16.mxu0 0
      %635 = vmatmul.mubr.bf16.gmra.mrb[0].mxu0 %v530
      %v636 = vpop.f32.mrb[0].mxu0
      %v637 = vadd.f32 0.0, %v636
      %v638 = vpop.f32.mrb[0].mxu0
      %v639 = vpop.f32.mrb[0].mxu0
      %v640 = vadd.f32 0.0, %v639
      %v641 = vpop.f32.mrb[0].mxu0
      %642 = vmatprep.mubr.bf16.mxu0 0
      %643 = vmatmul.mubr.bf16.gmra.mrb[0].mxu0 %v533
      %v644 = vpop.f32.mrb[0].mxu0
      %v645 = vadd.f32 0.0, %v644
      %v646 = vpop.f32.mrb[0].mxu0
      %v647 = vpop.f32.mrb[0].mxu0
      %v648 = vadd.f32 0.0, %v647
      %v649 = vpop.f32.mrb[0].mxu0
      %650 = vmatprep.mubr.bf16.mxu0 0
      %651 = vmatmul.mubr.bf16.gmra.mrb[0].mxu0 %v536
      %v652 = vpop.f32.mrb[0].mxu0
      %v653 = vadd.f32 0.0, %v652
      %v654 = vpop.f32.mrb[0].mxu0
      %v655 = vpop.f32.mrb[0].mxu0
      %v656 = vadd.f32 0.0, %v655
      %v657 = vpop.f32.mrb[0].mxu0
      %658 = vdwg.mxu0
      %v659 = vld [vmem:[#allocation2] sm:$0xff]
      %v660 = vld [vmem:[#allocation2 + $0x8] sm:$0xff]
      %v661 = vld [vmem:[#allocation2 + $0x10] sm:$0xff]
      %v662 = vld [vmem:[#allocation2 + $0x18] sm:$0xff]
      %v663 = vld [vmem:[#allocation2 + $0x20] sm:$0xff]
      %v664 = vld [vmem:[#allocation2 + $0x28] sm:$0xff]
      %v665 = vld [vmem:[#allocation2 + $0x30] sm:$0xff]
      %v666 = vld [vmem:[#allocation2 + $0x38] sm:$0xff]
      %v667 = vld [vmem:[#allocation2 + $0x40] sm:$0xff]
      %v668 = vld [vmem:[#allocation2 + $0x48] sm:$0xff]
      %v669 = vld [vmem:[#allocation2 + $0x50] sm:$0xff]
      %v670 = vld [vmem:[#allocation2 + $0x58] sm:$0xff]
      %v671 = vld [vmem:[#allocation2 + $0x60] sm:$0xff]
      %v672 = vld [vmem:[#allocation2 + $0x68] sm:$0xff]
      %v673 = vld [vmem:[#allocation2 + $0x70] sm:$0xff]
      %v674 = vld [vmem:[#allocation2 + $0x78] sm:$0xff]
      %675 = vmax.xlane.f32.xlu0 %v597
      %v676 = vpop.xlane.xlu0 %675
      %677 = vmax.xlane.f32.xlu0 %v600
      %v678 = vpop.xlane.xlu0 %677
      %679 = vmax.xlane.f32.xlu0 %v605
      %v680 = vpop.xlane.xlu0 %679
      %681 = vmax.xlane.f32.xlu0 %v608
      %v682 = vpop.xlane.xlu0 %681
      %683 = vmax.xlane.f32.xlu0 %v613
      %v684 = vpop.xlane.xlu0 %683
      %685 = vmax.xlane.f32.xlu0 %v616
      %v686 = vpop.xlane.xlu0 %685
      %687 = vmax.xlane.f32.xlu0 %v621
      %v688 = vpop.xlane.xlu0 %687
      %689 = vmax.xlane.f32.xlu0 %v624
      %v690 = vpop.xlane.xlu0 %689
      %691 = vmax.xlane.f32.xlu0 %v629
      %v692 = vpop.xlane.xlu0 %691
      %693 = vmax.xlane.f32.xlu0 %v632
      %v694 = vpop.xlane.xlu0 %693
      %695 = vmax.xlane.f32.xlu0 %v637
      %v696 = vpop.xlane.xlu0 %695
      %697 = vmax.xlane.f32.xlu0 %v640
      %v698 = vpop.xlane.xlu0 %697
      %699 = vmax.xlane.f32.xlu0 %v645
      %v700 = vpop.xlane.xlu0 %699
      %701 = vmax.xlane.f32.xlu0 %v648
      %v702 = vpop.xlane.xlu0 %701
      %703 = vmax.xlane.f32.xlu0 %v653
      %v704 = vpop.xlane.xlu0 %703
      %705 = vmax.xlane.f32.xlu0 %v656
      %v706 = vpop.xlane.xlu0 %705
      %v707 = vmax.f32 %v659, %v676
      %v708 = vmax.f32 %v660, %v678
      %v709 = vmax.f32 %v661, %v680
      %v710 = vmax.f32 %v662, %v682
      %v711 = vmax.f32 %v663, %v684
      %v712 = vmax.f32 %v664, %v686
      %v713 = vmax.f32 %v665, %v688
      %v714 = vmax.f32 %v666, %v690
      %v715 = vmax.f32 %v667, %v692
      %v716 = vmax.f32 %v668, %v694
      %v717 = vmax.f32 %v669, %v696
      %v718 = vmax.f32 %v670, %v698
      %v719 = vmax.f32 %v671, %v700
      %v720 = vmax.f32 %v672, %v702
      %v721 = vmax.f32 %v673, %v704
      %v722 = vmax.f32 %v674, %v706
      %v723 = vsub.f32 %v659, %v707
      %v724 = vsub.f32 %v660, %v708
      %v725 = vsub.f32 %v661, %v709
      %v726 = vsub.f32 %v662, %v710
      %v727 = vsub.f32 %v663, %v711
      %v728 = vsub.f32 %v664, %v712
      %v729 = vsub.f32 %v665, %v713
      %v730 = vsub.f32 %v666, %v714
      %v731 = vsub.f32 %v667, %v715
      %v732 = vsub.f32 %v668, %v716
      %v733 = vsub.f32 %v669, %v717
      %v734 = vsub.f32 %v670, %v718
      %v735 = vsub.f32 %v671, %v719
      %v736 = vsub.f32 %v672, %v720
      %v737 = vsub.f32 %v673, %v721
      %v738 = vsub.f32 %v674, %v722
      %v739 = vmul.f32 %v723, 1.442695
      %v740 = vpow.pop %v739
      %v741 = vmul.f32 %v724, 1.442695
      %v742 = vpow.pop %v741
      %v743 = vmul.f32 %v725, 1.442695
      %v744 = vpow.pop %v743
      %v745 = vmul.f32 %v726, 1.442695
      %v746 = vpow.pop %v745
      %v747 = vmul.f32 %v727, 1.442695
      %v748 = vpow.pop %v747
      %v749 = vmul.f32 %v728, 1.442695
      %v750 = vpow.pop %v749
      %v751 = vmul.f32 %v729, 1.442695
      %v752 = vpow.pop %v751
      %v753 = vmul.f32 %v730, 1.442695
      %v754 = vpow.pop %v753
      %v755 = vmul.f32 %v731, 1.442695
      %v756 = vpow.pop %v755
      %v757 = vmul.f32 %v732, 1.442695
      %v758 = vpow.pop %v757
      %v759 = vmul.f32 %v733, 1.442695
      %v760 = vpow.pop %v759
      %v761 = vmul.f32 %v734, 1.442695
      %v762 = vpow.pop %v761
      %v763 = vmul.f32 %v735, 1.442695
      %v764 = vpow.pop %v763
      %v765 = vmul.f32 %v736, 1.442695
      %v766 = vpow.pop %v765
      %v767 = vmul.f32 %v737, 1.442695
      %v768 = vpow.pop %v767
      %v769 = vmul.f32 %v738, 1.442695
      %v770 = vpow.pop %v769
      %772 = vset.pattern.permute.xlu0 0
      %773 = vperm.xlu0 %772, %v707
      %v774 = vpop.permute.xlu0 %773
      %777 = vset.pattern.permute.xlu0 0
      %778 = vperm.xlu0 %777, %v708
      %v779 = vpop.permute.xlu0 %778
      %782 = vset.pattern.permute.xlu0 0
      %783 = vperm.xlu0 %782, %v709
      %v784 = vpop.permute.xlu0 %783
      %787 = vset.pattern.permute.xlu0 0
      %788 = vperm.xlu0 %787, %v710
      %v789 = vpop.permute.xlu0 %788
      %792 = vset.pattern.permute.xlu0 0
      %793 = vperm.xlu0 %792, %v711
      %v794 = vpop.permute.xlu0 %793
      %797 = vset.pattern.permute.xlu0 0
      %798 = vperm.xlu0 %797, %v712
      %v799 = vpop.permute.xlu0 %798
      %802 = vset.pattern.permute.xlu0 0
      %803 = vperm.xlu0 %802, %v713
      %v804 = vpop.permute.xlu0 %803
      %807 = vset.pattern.permute.xlu0 0
      %808 = vperm.xlu0 %807, %v714
      %v809 = vpop.permute.xlu0 %808
      %812 = vset.pattern.permute.xlu0 0
      %813 = vperm.xlu0 %812, %v715
      %v814 = vpop.permute.xlu0 %813
      %817 = vset.pattern.permute.xlu0 0
      %818 = vperm.xlu0 %817, %v716
      %v819 = vpop.permute.xlu0 %818
      %822 = vset.pattern.permute.xlu0 0
      %823 = vperm.xlu0 %822, %v717
      %v824 = vpop.permute.xlu0 %823
      %827 = vset.pattern.permute.xlu0 0
      %828 = vperm.xlu0 %827, %v718
      %v829 = vpop.permute.xlu0 %828
      %832 = vset.pattern.permute.xlu0 0
      %833 = vperm.xlu0 %832, %v719
      %v834 = vpop.permute.xlu0 %833
      %837 = vset.pattern.permute.xlu0 0
      %838 = vperm.xlu0 %837, %v720
      %v839 = vpop.permute.xlu0 %838
      %842 = vset.pattern.permute.xlu0 0
      %843 = vperm.xlu0 %842, %v721
      %v844 = vpop.permute.xlu0 %843
      %847 = vset.pattern.permute.xlu0 0
      %848 = vperm.xlu0 %847, %v722
      %v849 = vpop.permute.xlu0 %848
      %v851 = vsub.f32 %v597, %v774
      %v852 = vsub.f32 %v600, %v779
      %v853 = vsub.f32 %v605, %v784
      %v854 = vsub.f32 %v608, %v789
      %v855 = vsub.f32 %v613, %v794
      %v856 = vsub.f32 %v616, %v799
      %v857 = vsub.f32 %v621, %v804
      %v858 = vsub.f32 %v624, %v809
      %v859 = vsub.f32 %v629, %v814
      %v860 = vsub.f32 %v632, %v819
      %v861 = vsub.f32 %v637, %v824
      %v862 = vsub.f32 %v640, %v829
      %v863 = vsub.f32 %v645, %v834
      %v864 = vsub.f32 %v648, %v839
      %v865 = vsub.f32 %v653, %v844
      %v866 = vsub.f32 %v656, %v849
      %v867 = vmul.f32 %v851, 1.442695
      %v868 = vpow.pop %v867
      %v869 = vmul.f32 %v852, 1.442695
      %v870 = vpow.pop %v869
      %v871 = vmul.f32 %v853, 1.442695
      %v872 = vpow.pop %v871
      %v873 = vmul.f32 %v854, 1.442695
      %v874 = vpow.pop %v873
      %v875 = vmul.f32 %v855, 1.442695
      %v876 = vpow.pop %v875
      %v877 = vmul.f32 %v856, 1.442695
      %v878 = vpow.pop %v877
      %v879 = vmul.f32 %v857, 1.442695
      %v880 = vpow.pop %v879
      %v881 = vmul.f32 %v858, 1.442695
      %v882 = vpow.pop %v881
      %v883 = vmul.f32 %v859, 1.442695
      %v884 = vpow.pop %v883
      %v885 = vmul.f32 %v860, 1.442695
      %v886 = vpow.pop %v885
      %v887 = vmul.f32 %v861, 1.442695
      %v888 = vpow.pop %v887
      %v889 = vmul.f32 %v862, 1.442695
      %v890 = vpow.pop %v889
      %v891 = vmul.f32 %v863, 1.442695
      %v892 = vpow.pop %v891
      %v893 = vmul.f32 %v864, 1.442695
      %v894 = vpow.pop %v893
      %v895 = vmul.f32 %v865, 1.442695
      %v896 = vpow.pop %v895
      %v897 = vmul.f32 %v866, 1.442695
      %v898 = vpow.pop %v897
      %v899 = vld [vmem:[#allocation3] sm:$0xff]
      %v900 = vld [vmem:[#allocation3 + $0x8] sm:$0xff]
      %v901 = vld [vmem:[#allocation3 + $0x10] sm:$0xff]
      %v902 = vld [vmem:[#allocation3 + $0x18] sm:$0xff]
      %v903 = vld [vmem:[#allocation3 + $0x20] sm:$0xff]
      %v904 = vld [vmem:[#allocation3 + $0x28] sm:$0xff]
      %v905 = vld [vmem:[#allocation3 + $0x30] sm:$0xff]
      %v906 = vld [vmem:[#allocation3 + $0x38] sm:$0xff]
      %v907 = vld [vmem:[#allocation3 + $0x40] sm:$0xff]
      %v908 = vld [vmem:[#allocation3 + $0x48] sm:$0xff]
      %v909 = vld [vmem:[#allocation3 + $0x50] sm:$0xff]
      %v910 = vld [vmem:[#allocation3 + $0x58] sm:$0xff]
      %v911 = vld [vmem:[#allocation3 + $0x60] sm:$0xff]
      %v912 = vld [vmem:[#allocation3 + $0x68] sm:$0xff]
      %v913 = vld [vmem:[#allocation3 + $0x70] sm:$0xff]
      %v914 = vld [vmem:[#allocation3 + $0x78] sm:$0xff]
      %v915 = vmul.f32 %v740, %v899
      %v916 = vmul.f32 %v742, %v900
      %v917 = vmul.f32 %v744, %v901
      %v918 = vmul.f32 %v746, %v902
      %v919 = vmul.f32 %v748, %v903
      %v920 = vmul.f32 %v750, %v904
      %v921 = vmul.f32 %v752, %v905
      %v922 = vmul.f32 %v754, %v906
      %v923 = vmul.f32 %v756, %v907
      %v924 = vmul.f32 %v758, %v908
      %v925 = vmul.f32 %v760, %v909
      %v926 = vmul.f32 %v762, %v910
      %v927 = vmul.f32 %v764, %v911
      %v928 = vmul.f32 %v766, %v912
      %v929 = vmul.f32 %v768, %v913
      %v930 = vmul.f32 %v770, %v914
      %931 = vadd.xlane.f32.xlu0 %v868
      %v932 = vpop.xlane.xlu0 %931
      %933 = vadd.xlane.f32.xlu0 %v870
      %v934 = vpop.xlane.xlu0 %933
      %935 = vadd.xlane.f32.xlu0 %v872
      %v936 = vpop.xlane.xlu0 %935
      %937 = vadd.xlane.f32.xlu0 %v874
      %v938 = vpop.xlane.xlu0 %937
      %939 = vadd.xlane.f32.xlu0 %v876
      %v940 = vpop.xlane.xlu0 %939
      %941 = vadd.xlane.f32.xlu0 %v878
      %v942 = vpop.xlane.xlu0 %941
      %943 = vadd.xlane.f32.xlu0 %v880
      %v944 = vpop.xlane.xlu0 %943
      %945 = vadd.xlane.f32.xlu0 %v882
      %v946 = vpop.xlane.xlu0 %945
      %947 = vadd.xlane.f32.xlu0 %v884
      %v948 = vpop.xlane.xlu0 %947
      %949 = vadd.xlane.f32.xlu0 %v886
      %v950 = vpop.xlane.xlu0 %949
      %951 = vadd.xlane.f32.xlu0 %v888
      %v952 = vpop.xlane.xlu0 %951
      %953 = vadd.xlane.f32.xlu0 %v890
      %v954 = vpop.xlane.xlu0 %953
      %955 = vadd.xlane.f32.xlu0 %v892
      %v956 = vpop.xlane.xlu0 %955
      %957 = vadd.xlane.f32.xlu0 %v894
      %v958 = vpop.xlane.xlu0 %957
      %959 = vadd.xlane.f32.xlu0 %v896
      %v960 = vpop.xlane.xlu0 %959
      %961 = vadd.xlane.f32.xlu0 %v898
      %v962 = vpop.xlane.xlu0 %961
      %v963 = vadd.f32 %v915, %v932
      %v964 = vadd.f32 %v916, %v934
      %v965 = vadd.f32 %v917, %v936
      %v966 = vadd.f32 %v918, %v938
      %v967 = vadd.f32 %v919, %v940
      %v968 = vadd.f32 %v920, %v942
      %v969 = vadd.f32 %v921, %v944
      %v970 = vadd.f32 %v922, %v946
      %v971 = vadd.f32 %v923, %v948
      %v972 = vadd.f32 %v924, %v950
      %v973 = vadd.f32 %v925, %v952
      %v974 = vadd.f32 %v926, %v954
      %v975 = vadd.f32 %v927, %v956
      %v976 = vadd.f32 %v928, %v958
      %v977 = vadd.f32 %v929, %v960
      %v978 = vadd.f32 %v930, %v962
      %vm979 = vcmask 7168
      %980 = vst.msk [vmem:[#allocation3] sm:$0xff] %vm979, %v963
      %981 = vst.msk [vmem:[#allocation3 + $0x8] sm:$0xff] %vm979, %v964
      %982 = vst.msk [vmem:[#allocation3 + $0x10] sm:$0xff] %vm979, %v965
      %983 = vst.msk [vmem:[#allocation3 + $0x18] sm:$0xff] %vm979, %v966
      %984 = vst.msk [vmem:[#allocation3 + $0x20] sm:$0xff] %vm979, %v967
      %985 = vst.msk [vmem:[#allocation3 + $0x28] sm:$0xff] %vm979, %v968
      %986 = vst.msk [vmem:[#allocation3 + $0x30] sm:$0xff] %vm979, %v969
      %987 = vst.msk [vmem:[#allocation3 + $0x38] sm:$0xff] %vm979, %v970
      %988 = vst.msk [vmem:[#allocation3 + $0x40] sm:$0xff] %vm979, %v971
      %989 = vst.msk [vmem:[#allocation3 + $0x48] sm:$0xff] %vm979, %v972
      %990 = vst.msk [vmem:[#allocation3 + $0x50] sm:$0xff] %vm979, %v973
      %991 = vst.msk [vmem:[#allocation3 + $0x58] sm:$0xff] %vm979, %v974
      %992 = vst.msk [vmem:[#allocation3 + $0x60] sm:$0xff] %vm979, %v975
      %993 = vst.msk [vmem:[#allocation3 + $0x68] sm:$0xff] %vm979, %v976
      %994 = vst.msk [vmem:[#allocation3 + $0x70] sm:$0xff] %vm979, %v977
      %995 = vst.msk [vmem:[#allocation3 + $0x78] sm:$0xff] %vm979, %v978
      %v996 = vld [vmem:[#allocation4] sm:$0xff]
      %v997 = vld [vmem:[#allocation4 + $0x8] sm:$0xff]
      %v998 = vld [vmem:[#allocation4 + $0x10] sm:$0xff]
      %v999 = vld [vmem:[#allocation4 + $0x18] sm:$0xff]
      %v1000 = vld [vmem:[#allocation4 + $0x20] sm:$0xff]
      %v1001 = vld [vmem:[#allocation4 + $0x28] sm:$0xff]
      %v1002 = vld [vmem:[#allocation4 + $0x30] sm:$0xff]
      %v1003 = vld [vmem:[#allocation4 + $0x38] sm:$0xff]
      %v1004 = vld [vmem:[#allocation4 + $0x40] sm:$0xff]
      %v1005 = vld [vmem:[#allocation4 + $0x48] sm:$0xff]
      %v1006 = vld [vmem:[#allocation4 + $0x50] sm:$0xff]
      %v1007 = vld [vmem:[#allocation4 + $0x58] sm:$0xff]
      %v1008 = vld [vmem:[#allocation4 + $0x60] sm:$0xff]
      %v1009 = vld [vmem:[#allocation4 + $0x68] sm:$0xff]
      %v1010 = vld [vmem:[#allocation4 + $0x70] sm:$0xff]
      %v1011 = vld [vmem:[#allocation4 + $0x78] sm:$0xff]
      %1013 = vset.pattern.permute.xlu0 0
      %1014 = vperm.xlu0 %1013, %v740
      %v1015 = vpop.permute.xlu0 %1014
      %1018 = vset.pattern.permute.xlu0 0
      %1019 = vperm.xlu0 %1018, %v742
      %v1020 = vpop.permute.xlu0 %1019
      %1023 = vset.pattern.permute.xlu0 0
      %1024 = vperm.xlu0 %1023, %v744
      %v1025 = vpop.permute.xlu0 %1024
      %1028 = vset.pattern.permute.xlu0 0
      %1029 = vperm.xlu0 %1028, %v746
      %v1030 = vpop.permute.xlu0 %1029
      %1033 = vset.pattern.permute.xlu0 0
      %1034 = vperm.xlu0 %1033, %v748
      %v1035 = vpop.permute.xlu0 %1034
      %1038 = vset.pattern.permute.xlu0 0
      %1039 = vperm.xlu0 %1038, %v750
      %v1040 = vpop.permute.xlu0 %1039
      %1043 = vset.pattern.permute.xlu0 0
      %1044 = vperm.xlu0 %1043, %v752
      %v1045 = vpop.permute.xlu0 %1044
      %1048 = vset.pattern.permute.xlu0 0
      %1049 = vperm.xlu0 %1048, %v754
      %v1050 = vpop.permute.xlu0 %1049
      %1053 = vset.pattern.permute.xlu0 0
      %1054 = vperm.xlu0 %1053, %v756
      %v1055 = vpop.permute.xlu0 %1054
      %1058 = vset.pattern.permute.xlu0 0
      %1059 = vperm.xlu0 %1058, %v758
      %v1060 = vpop.permute.xlu0 %1059
      %1063 = vset.pattern.permute.xlu0 0
      %1064 = vperm.xlu0 %1063, %v760
      %v1065 = vpop.permute.xlu0 %1064
      %1068 = vset.pattern.permute.xlu0 0
      %1069 = vperm.xlu0 %1068, %v762
      %v1070 = vpop.permute.xlu0 %1069
      %1073 = vset.pattern.permute.xlu0 0
      %1074 = vperm.xlu0 %1073, %v764
      %v1075 = vpop.permute.xlu0 %1074
      %1078 = vset.pattern.permute.xlu0 0
      %1079 = vperm.xlu0 %1078, %v766
      %v1080 = vpop.permute.xlu0 %1079
      %1083 = vset.pattern.permute.xlu0 0
      %1084 = vperm.xlu0 %1083, %v768
      %v1085 = vpop.permute.xlu0 %1084
      %1088 = vset.pattern.permute.xlu0 0
      %1089 = vperm.xlu0 %1088, %v770
      %v1090 = vpop.permute.xlu0 %1089
      %v1092 = vmul.f32 %v1015, %v996
      %v1093 = vmul.f32 %v1020, %v997
      %v1094 = vmul.f32 %v1025, %v998
      %v1095 = vmul.f32 %v1030, %v999
      %v1096 = vmul.f32 %v1035, %v1000
      %v1097 = vmul.f32 %v1040, %v1001
      %v1098 = vmul.f32 %v1045, %v1002
      %v1099 = vmul.f32 %v1050, %v1003
      %v1100 = vmul.f32 %v1055, %v1004
      %v1101 = vmul.f32 %v1060, %v1005
      %v1102 = vmul.f32 %v1065, %v1006
      %v1103 = vmul.f32 %v1070, %v1007
      %v1104 = vmul.f32 %v1075, %v1008
      %v1105 = vmul.f32 %v1080, %v1009
      %v1106 = vmul.f32 %v1085, %v1010
      %v1107 = vmul.f32 %v1090, %v1011
      %v1108 = vpack.c.bf16 %v870, %v868
      %v1109 = vpack.c.bf16 %v874, %v872
      %v1110 = vpack.c.bf16 %v878, %v876
      %v1111 = vpack.c.bf16 %v882, %v880
      %v1112 = vpack.c.bf16 %v886, %v884
      %v1113 = vpack.c.bf16 %v890, %v888
      %v1114 = vpack.c.bf16 %v894, %v892
      %v1115 = vpack.c.bf16 %v898, %v896
      %v1132 = vunpack.c.l.b16 %v417
      %v1133 = vunpack.c.l.b16 %v418
      %v1134 = vunpack.c.l.b16 %v419
      %v1135 = vunpack.c.l.b16 %v420
      %v1136 = vunpack.c.l.b16 %v421
      %v1137 = vunpack.c.l.b16 %v422
      %v1138 = vunpack.c.l.b16 %v423
      %v1139 = vunpack.c.l.b16 %v424
      %v1140 = vunpack.c.l.b16 %v425
      %v1141 = vunpack.c.l.b16 %v426
      %v1142 = vunpack.c.l.b16 %v427
      %v1143 = vunpack.c.l.b16 %v428
      %v1144 = vunpack.c.l.b16 %v429
      %v1145 = vunpack.c.l.b16 %v430
      %v1146 = vunpack.c.l.b16 %v431
      %v1147 = vunpack.c.l.b16 %v432
      %v1148 = vpack.c.b16 %v1133, %v1132
      %v1149 = vpack.c.b16 %v1135, %v1134
      %v1150 = vpack.c.b16 %v1137, %v1136
      %v1151 = vpack.c.b16 %v1139, %v1138
      %v1152 = vpack.c.b16 %v1141, %v1140
      %v1153 = vpack.c.b16 %v1143, %v1142
      %v1154 = vpack.c.b16 %v1145, %v1144
      %v1155 = vpack.c.b16 %v1147, %v1146
      %1164 = vmatprep.subr.bf16.mxu0 0
      %1165 = vmatpush1.bf16.msra.mxu0 %v1148
      %1166 = vmatprep.subr.bf16.mxu0 0
      %1167 = vmatpush1.bf16.msra.mxu0 %v1149
      %1168 = vmatprep.subr.bf16.mxu0 0
      %1169 = vmatpush1.bf16.msra.mxu0 %v1150
      %1170 = vmatprep.subr.bf16.mxu0 0
      %1171 = vmatpush1.bf16.msra.mxu0 %v1151
      %1172 = vmatprep.subr.bf16.mxu0 0
      %1173 = vmatpush1.bf16.msra.mxu0 %v1152
      %1174 = vmatprep.subr.bf16.mxu0 0
      %1175 = vmatpush1.bf16.msra.mxu0 %v1153
      %1176 = vmatprep.subr.bf16.mxu0 0
      %1177 = vmatpush1.bf16.msra.mxu0 %v1154
      %1178 = vmatprep.subr.bf16.mxu0 0
      %1179 = vmatpush1.bf16.msra.mxu0 %v1155
      %1180 = vmatprep.subr.bf16.mxu0 0
      %1181 = vmatpush1.bf16.msra.mxu0 0
      %1182 = vmatprep.subr.bf16.mxu0 0
      %1183 = vmatpush1.bf16.msra.mxu0 0
      %1184 = vmatprep.subr.bf16.mxu0 0
      %1185 = vmatpush1.bf16.msra.mxu0 0
      %1186 = vmatprep.subr.bf16.mxu0 0
      %1187 = vmatpush1.bf16.msra.mxu0 0
      %1188 = vmatprep.subr.bf16.mxu0 0
      %1189 = vmatpush1.bf16.msra.mxu0 0
      %1190 = vmatprep.subr.bf16.mxu0 0
      %1191 = vmatpush1.bf16.msra.mxu0 0
      %1192 = vmatprep.subr.bf16.mxu0 0
      %1193 = vmatpush1.bf16.msra.mxu0 0
      %1194 = vmatprep.subr.bf16.mxu0 0
      %1195 = vmatpush1.bf16.msra.mxu0 0
      %1196 = vmatprep.mubr.bf16.mxu0 0
      %1197 = vmatmul.mubr.bf16.gmra.mrb[0].mxu0 %v1108
      %v1198 = vpop.f32.mrb[0].mxu0
      %v1199 = vadd.f32 0.0, %v1198
      %v1200 = vpop.f32.mrb[0].mxu0
      %v1201 = vpop.f32.mrb[0].mxu0
      %v1202 = vadd.f32 0.0, %v1201
      %v1203 = vpop.f32.mrb[0].mxu0
      %1204 = vmatprep.mubr.bf16.mxu0 0
      %1205 = vmatmul.mubr.bf16.gmra.mrb[0].mxu0 %v1109
      %v1206 = vpop.f32.mrb[0].mxu0
      %v1207 = vadd.f32 0.0, %v1206
      %v1208 = vpop.f32.mrb[0].mxu0
      %v1209 = vpop.f32.mrb[0].mxu0
      %v1210 = vadd.f32 0.0, %v1209
      %v1211 = vpop.f32.mrb[0].mxu0
      %1212 = vmatprep.mubr.bf16.mxu0 0
      %1213 = vmatmul.mubr.bf16.gmra.mrb[0].mxu0 %v1110
      %v1214 = vpop.f32.mrb[0].mxu0
      %v1215 = vadd.f32 0.0, %v1214
      %v1216 = vpop.f32.mrb[0].mxu0
      %v1217 = vpop.f32.mrb[0].mxu0
      %v1218 = vadd.f32 0.0, %v1217
      %v1219 = vpop.f32.mrb[0].mxu0
      %1220 = vmatprep.mubr.bf16.mxu0 0
      %1221 = vmatmul.mubr.bf16.gmra.mrb[0].mxu0 %v1111
      %v1222 = vpop.f32.mrb[0].mxu0
      %v1223 = vadd.f32 0.0, %v1222
      %v1224 = vpop.f32.mrb[0].mxu0
      %v1225 = vpop.f32.mrb[0].mxu0
      %v1226 = vadd.f32 0.0, %v1225
      %v1227 = vpop.f32.mrb[0].mxu0
      %1228 = vmatprep.mubr.bf16.mxu0 0
      %1229 = vmatmul.mubr.bf16.gmra.mrb[0].mxu0 %v1112
      %v1230 = vpop.f32.mrb[0].mxu0
      %v1231 = vadd.f32 0.0, %v1230
      %v1232 = vpop.f32.mrb[0].mxu0
      %v1233 = vpop.f32.mrb[0].mxu0
      %v1234 = vadd.f32 0.0, %v1233
      %v1235 = vpop.f32.mrb[0].mxu0
      %1236 = vmatprep.mubr.bf16.mxu0 0
      %1237 = vmatmul.mubr.bf16.gmra.mrb[0].mxu0 %v1113
      %v1238 = vpop.f32.mrb[0].mxu0
      %v1239 = vadd.f32 0.0, %v1238
      %v1240 = vpop.f32.mrb[0].mxu0
      %v1241 = vpop.f32.mrb[0].mxu0
      %v1242 = vadd.f32 0.0, %v1241
      %v1243 = vpop.f32.mrb[0].mxu0
      %1244 = vmatprep.mubr.bf16.mxu0 0
      %1245 = vmatmul.mubr.bf16.gmra.mrb[0].mxu0 %v1114
      %v1246 = vpop.f32.mrb[0].mxu0
      %v1247 = vadd.f32 0.0, %v1246
      %v1248 = vpop.f32.mrb[0].mxu0
      %v1249 = vpop.f32.mrb[0].mxu0
      %v1250 = vadd.f32 0.0, %v1249
      %v1251 = vpop.f32.mrb[0].mxu0
      %1252 = vmatprep.mubr.bf16.mxu0 0
      %1253 = vmatmul.mubr.bf16.gmra.mrb[0].mxu0 %v1115
      %v1254 = vpop.f32.mrb[0].mxu0
      %v1255 = vadd.f32 0.0, %v1254
      %v1256 = vpop.f32.mrb[0].mxu0
      %v1257 = vpop.f32.mrb[0].mxu0
      %v1258 = vadd.f32 0.0, %v1257
      %v1259 = vpop.f32.mrb[0].mxu0
      %1260 = vdwg.mxu0
      %v1261 = vadd.f32 %v1092, %v1199
      %v1262 = vadd.f32 %v1093, %v1202
      %v1263 = vadd.f32 %v1094, %v1207
      %v1264 = vadd.f32 %v1095, %v1210
      %v1265 = vadd.f32 %v1096, %v1215
      %v1266 = vadd.f32 %v1097, %v1218
      %v1267 = vadd.f32 %v1098, %v1223
      %v1268 = vadd.f32 %v1099, %v1226
      %v1269 = vadd.f32 %v1100, %v1231
      %v1270 = vadd.f32 %v1101, %v1234
      %v1271 = vadd.f32 %v1102, %v1239
      %v1272 = vadd.f32 %v1103, %v1242
      %v1273 = vadd.f32 %v1104, %v1247
      %v1274 = vadd.f32 %v1105, %v1250
      %v1275 = vadd.f32 %v1106, %v1255
      %v1276 = vadd.f32 %v1107, %v1258
      %1277 = vst.msk [vmem:[#allocation4] sm:$0xff] %vm513, %v1261
      %1278 = vst.msk [vmem:[#allocation4 + $0x8] sm:$0xff] %vm513, %v1262
      %1279 = vst.msk [vmem:[#allocation4 + $0x10] sm:$0xff] %vm513, %v1263
      %1280 = vst.msk [vmem:[#allocation4 + $0x18] sm:$0xff] %vm513, %v1264
      %1281 = vst.msk [vmem:[#allocation4 + $0x20] sm:$0xff] %vm513, %v1265
      %1282 = vst.msk [vmem:[#allocation4 + $0x28] sm:$0xff] %vm513, %v1266
      %1283 = vst.msk [vmem:[#allocation4 + $0x30] sm:$0xff] %vm513, %v1267
      %1284 = vst.msk [vmem:[#allocation4 + $0x38] sm:$0xff] %vm513, %v1268
      %1285 = vst.msk [vmem:[#allocation4 + $0x40] sm:$0xff] %vm513, %v1269
      %1286 = vst.msk [vmem:[#allocation4 + $0x48] sm:$0xff] %vm513, %v1270
      %1287 = vst.msk [vmem:[#allocation4 + $0x50] sm:$0xff] %vm513, %v1271
      %1288 = vst.msk [vmem:[#allocation4 + $0x58] sm:$0xff] %vm513, %v1272
      %1289 = vst.msk [vmem:[#allocation4 + $0x60] sm:$0xff] %vm513, %v1273
      %1290 = vst.msk [vmem:[#allocation4 + $0x68] sm:$0xff] %vm513, %v1274
      %1291 = vst.msk [vmem:[#allocation4 + $0x70] sm:$0xff] %vm513, %v1275
      %1292 = vst.msk [vmem:[#allocation4 + $0x78] sm:$0xff] %vm513, %v1276
      %1293 = vst.msk [vmem:[#allocation2] sm:$0xff] %vm979, %v707
      %1294 = vst.msk [vmem:[#allocation2 + $0x8] sm:$0xff] %vm979, %v708
      %1295 = vst.msk [vmem:[#allocation2 + $0x10] sm:$0xff] %vm979, %v709
      %1296 = vst.msk [vmem:[#allocation2 + $0x18] sm:$0xff] %vm979, %v710
      %1297 = vst.msk [vmem:[#allocation2 + $0x20] sm:$0xff] %vm979, %v711
      %1298 = vst.msk [vmem:[#allocation2 + $0x28] sm:$0xff] %vm979, %v712
      %1299 = vst.msk [vmem:[#allocation2 + $0x30] sm:$0xff] %vm979, %v713
      %1300 = vst.msk [vmem:[#allocation2 + $0x38] sm:$0xff] %vm979, %v714
      %1301 = vst.msk [vmem:[#allocation2 + $0x40] sm:$0xff] %vm979, %v715
      %1302 = vst.msk [vmem:[#allocation2 + $0x48] sm:$0xff] %vm979, %v716
      %1303 = vst.msk [vmem:[#allocation2 + $0x50] sm:$0xff] %vm979, %v717
      %1304 = vst.msk [vmem:[#allocation2 + $0x58] sm:$0xff] %vm979, %v718
      %1305 = vst.msk [vmem:[#allocation2 + $0x60] sm:$0xff] %vm979, %v719
      %1306 = vst.msk [vmem:[#allocation2 + $0x68] sm:$0xff] %vm979, %v720
      %1307 = vst.msk [vmem:[#allocation2 + $0x70] sm:$0xff] %vm979, %v721
      %1308 = vst.msk [vmem:[#allocation2 + $0x78] sm:$0xff] %vm979, %v722
      // Predicated region
      $region37: #{tpu_custom_call.1} parent=31 // pred_check
        %p1309 = pneg %p315
      $region38: #{tpu_custom_call.1} parent=31 // pred_check_branch
        %1311 = sbr.rel (%p1309) target = $region40
      $region39: #{tpu_custom_call.1} parent=31 // pred_region
        %v1312 = vld [vmem:[#allocation3] sm:$0xff]
        %v1313 = vld [vmem:[#allocation3 + $0x8] sm:$0xff]
        %v1314 = vld [vmem:[#allocation3 + $0x10] sm:$0xff]
        %v1315 = vld [vmem:[#allocation3 + $0x18] sm:$0xff]
        %v1316 = vld [vmem:[#allocation3 + $0x20] sm:$0xff]
        %v1317 = vld [vmem:[#allocation3 + $0x28] sm:$0xff]
        %v1318 = vld [vmem:[#allocation3 + $0x30] sm:$0xff]
        %v1319 = vld [vmem:[#allocation3 + $0x38] sm:$0xff]
        %v1320 = vld [vmem:[#allocation3 + $0x40] sm:$0xff]
        %v1321 = vld [vmem:[#allocation3 + $0x48] sm:$0xff]
        %v1322 = vld [vmem:[#allocation3 + $0x50] sm:$0xff]
        %v1323 = vld [vmem:[#allocation3 + $0x58] sm:$0xff]
        %v1324 = vld [vmem:[#allocation3 + $0x60] sm:$0xff]
        %v1325 = vld [vmem:[#allocation3 + $0x68] sm:$0xff]
        %v1326 = vld [vmem:[#allocation3 + $0x70] sm:$0xff]
        %v1327 = vld [vmem:[#allocation3 + $0x78] sm:$0xff]
        %v1328 = vrcp.pop %v1312
        %v1329 = vrcp.pop %v1313
        %v1330 = vrcp.pop %v1314
        %v1331 = vrcp.pop %v1315
        %v1332 = vrcp.pop %v1316
        %v1333 = vrcp.pop %v1317
        %v1334 = vrcp.pop %v1318
        %v1335 = vrcp.pop %v1319
        %v1336 = vrcp.pop %v1320
        %v1337 = vrcp.pop %v1321
        %v1338 = vrcp.pop %v1322
        %v1339 = vrcp.pop %v1323
        %v1340 = vrcp.pop %v1324
        %v1341 = vrcp.pop %v1325
        %v1342 = vrcp.pop %v1326
        %v1343 = vrcp.pop %v1327
        %v1344 = vld [vmem:[#allocation4] sm:$0xff]
        %v1345 = vld [vmem:[#allocation4 + $0x8] sm:$0xff]
        %v1346 = vld [vmem:[#allocation4 + $0x10] sm:$0xff]
        %v1347 = vld [vmem:[#allocation4 + $0x18] sm:$0xff]
        %v1348 = vld [vmem:[#allocation4 + $0x20] sm:$0xff]
        %v1349 = vld [vmem:[#allocation4 + $0x28] sm:$0xff]
        %v1350 = vld [vmem:[#allocation4 + $0x30] sm:$0xff]
        %v1351 = vld [vmem:[#allocation4 + $0x38] sm:$0xff]
        %v1352 = vld [vmem:[#allocation4 + $0x40] sm:$0xff]
        %v1353 = vld [vmem:[#allocation4 + $0x48] sm:$0xff]
        %v1354 = vld [vmem:[#allocation4 + $0x50] sm:$0xff]
        %v1355 = vld [vmem:[#allocation4 + $0x58] sm:$0xff]
        %v1356 = vld [vmem:[#allocation4 + $0x60] sm:$0xff]
        %v1357 = vld [vmem:[#allocation4 + $0x68] sm:$0xff]
        %v1358 = vld [vmem:[#allocation4 + $0x70] sm:$0xff]
        %v1359 = vld [vmem:[#allocation4 + $0x78] sm:$0xff]
        %1361 = vset.pattern.permute.xlu0 0
        %1362 = vperm.xlu0 %1361, %v1328
        %v1363 = vpop.permute.xlu0 %1362
        %1366 = vset.pattern.permute.xlu0 0
        %1367 = vperm.xlu0 %1366, %v1329
        %v1368 = vpop.permute.xlu0 %1367
        %1371 = vset.pattern.permute.xlu0 0
        %1372 = vperm.xlu0 %1371, %v1330
        %v1373 = vpop.permute.xlu0 %1372
        %1376 = vset.pattern.permute.xlu0 0
        %1377 = vperm.xlu0 %1376, %v1331
        %v1378 = vpop.permute.xlu0 %1377
        %1381 = vset.pattern.permute.xlu0 0
        %1382 = vperm.xlu0 %1381, %v1332
        %v1383 = vpop.permute.xlu0 %1382
        %1386 = vset.pattern.permute.xlu0 0
        %1387 = vperm.xlu0 %1386, %v1333
        %v1388 = vpop.permute.xlu0 %1387
        %1391 = vset.pattern.permute.xlu0 0
        %1392 = vperm.xlu0 %1391, %v1334
        %v1393 = vpop.permute.xlu0 %1392
        %1396 = vset.pattern.permute.xlu0 0
        %1397 = vperm.xlu0 %1396, %v1335
        %v1398 = vpop.permute.xlu0 %1397
        %1401 = vset.pattern.permute.xlu0 0
        %1402 = vperm.xlu0 %1401, %v1336
        %v1403 = vpop.permute.xlu0 %1402
        %1406 = vset.pattern.permute.xlu0 0
        %1407 = vperm.xlu0 %1406, %v1337
        %v1408 = vpop.permute.xlu0 %1407
        %1411 = vset.pattern.permute.xlu0 0
        %1412 = vperm.xlu0 %1411, %v1338
        %v1413 = vpop.permute.xlu0 %1412
        %1416 = vset.pattern.permute.xlu0 0
        %1417 = vperm.xlu0 %1416, %v1339
        %v1418 = vpop.permute.xlu0 %1417
        %1421 = vset.pattern.permute.xlu0 0
        %1422 = vperm.xlu0 %1421, %v1340
        %v1423 = vpop.permute.xlu0 %1422
        %1426 = vset.pattern.permute.xlu0 0
        %1427 = vperm.xlu0 %1426, %v1341
        %v1428 = vpop.permute.xlu0 %1427
        %1431 = vset.pattern.permute.xlu0 0
        %1432 = vperm.xlu0 %1431, %v1342
        %v1433 = vpop.permute.xlu0 %1432
        %1436 = vset.pattern.permute.xlu0 0
        %1437 = vperm.xlu0 %1436, %v1343
        %v1438 = vpop.permute.xlu0 %1437
        %v1440 = vmul.f32 %v1344, %v1363
        %v1441 = vmul.f32 %v1345, %v1368
        %v1442 = vmul.f32 %v1346, %v1373
        %v1443 = vmul.f32 %v1347, %v1378
        %v1444 = vmul.f32 %v1348, %v1383
        %v1445 = vmul.f32 %v1349, %v1388
        %v1446 = vmul.f32 %v1350, %v1393
        %v1447 = vmul.f32 %v1351, %v1398
        %v1448 = vmul.f32 %v1352, %v1403
        %v1449 = vmul.f32 %v1353, %v1408
        %v1450 = vmul.f32 %v1354, %v1413
        %v1451 = vmul.f32 %v1355, %v1418
        %v1452 = vmul.f32 %v1356, %v1423
        %v1453 = vmul.f32 %v1357, %v1428
        %v1454 = vmul.f32 %v1358, %v1433
        %v1455 = vmul.f32 %v1359, %v1438
        %v1456 = vpack.c.bf16 %v1441, %v1440
        %v1457 = vpack.c.bf16 %v1443, %v1442
        %v1458 = vpack.c.bf16 %v1445, %v1444
        %v1459 = vpack.c.bf16 %v1447, %v1446
        %v1460 = vpack.c.bf16 %v1449, %v1448
        %v1461 = vpack.c.bf16 %v1451, %v1450
        %v1462 = vpack.c.bf16 %v1453, %v1452
        %v1463 = vpack.c.bf16 %v1455, %v1454
        %v1472 = vunpack.c.l.b16 %v1456
        %v1473 = vunpack.c.h.b16 %v1456
        %v1474 = vunpack.c.l.b16 %v1457
        %v1475 = vunpack.c.h.b16 %v1457
        %v1476 = vunpack.c.l.b16 %v1458
        %v1477 = vunpack.c.h.b16 %v1458
        %v1478 = vunpack.c.l.b16 %v1459
        %v1479 = vunpack.c.h.b16 %v1459
        %v1480 = vunpack.c.l.b16 %v1460
        %v1481 = vunpack.c.h.b16 %v1460
        %v1482 = vunpack.c.l.b16 %v1461
        %v1483 = vunpack.c.h.b16 %v1461
        %v1484 = vunpack.c.l.b16 %v1462
        %v1485 = vunpack.c.h.b16 %v1462
        %v1486 = vunpack.c.l.b16 %v1463
        %v1487 = vunpack.c.h.b16 %v1463
        %v1488 = vpack.c.b16 %v1472, %v1472
        %v1489 = vpack.c.b16 %v1473, %v1473
        %v1490 = vpack.c.b16 %v1474, %v1474
        %v1491 = vpack.c.b16 %v1475, %v1475
        %v1492 = vpack.c.b16 %v1476, %v1476
        %v1493 = vpack.c.b16 %v1477, %v1477
        %v1494 = vpack.c.b16 %v1478, %v1478
        %v1495 = vpack.c.b16 %v1479, %v1479
        %v1496 = vpack.c.b16 %v1480, %v1480
        %v1497 = vpack.c.b16 %v1481, %v1481
        %v1498 = vpack.c.b16 %v1482, %v1482
        %v1499 = vpack.c.b16 %v1483, %v1483
        %v1500 = vpack.c.b16 %v1484, %v1484
        %v1501 = vpack.c.b16 %v1485, %v1485
        %v1502 = vpack.c.b16 %v1486, %v1486
        %v1503 = vpack.c.b16 %v1487, %v1487
        %vm1520 = vcmask 257024
        %1521 = vst.msk [vmem:[%s309] sm:$0xf] %vm1520, %v1488
        %1522 = vst.msk [vmem:[%s309 + $0x4] sm:$0xf] %vm1520, %v1489
        %1523 = vst.msk [vmem:[%s309 + $0x8] sm:$0xf] %vm1520, %v1490
        %1524 = vst.msk [vmem:[%s309 + $0xc] sm:$0xf] %vm1520, %v1491
        %1525 = vst.msk [vmem:[%s309 + $0x10] sm:$0xf] %vm1520, %v1492
        %1526 = vst.msk [vmem:[%s309 + $0x14] sm:$0xf] %vm1520, %v1493
        %1527 = vst.msk [vmem:[%s309 + $0x18] sm:$0xf] %vm1520, %v1494
        %1528 = vst.msk [vmem:[%s309 + $0x1c] sm:$0xf] %vm1520, %v1495
        %1529 = vst.msk [vmem:[%s309 + $0x20] sm:$0xf] %vm1520, %v1496
        %1530 = vst.msk [vmem:[%s309 + $0x24] sm:$0xf] %vm1520, %v1497
        %1531 = vst.msk [vmem:[%s309 + $0x28] sm:$0xf] %vm1520, %v1498
        %1532 = vst.msk [vmem:[%s309 + $0x2c] sm:$0xf] %vm1520, %v1499
        %1533 = vst.msk [vmem:[%s309 + $0x30] sm:$0xf] %vm1520, %v1500
        %1534 = vst.msk [vmem:[%s309 + $0x34] sm:$0xf] %vm1520, %v1501
        %1535 = vst.msk [vmem:[%s309 + $0x38] sm:$0xf] %vm1520, %v1502
        %1536 = vst.msk [vmem:[%s309 + $0x3c] sm:$0xf] %vm1520, %v1503
      $region40: #{tpu_custom_call.1} parent=31 // pred_fallthru
        _
      %s1537 = sld [smem:[#allocation6 + %s23]]
      %s1538 = smul.u32 16, %s1537
      %p1539 = scmp.lt.s32.totalorder %s22, 3
      %s1540 = scalar_select %p1539, %s22, 3
      %p1541 = scmp.lt.s32.totalorder %s1538, 15
      %s1542 = scalar_select %p1541, %s1538, 15
      %s1543 = smul.addr %s1540, 16
      %s1544 = sadd.s32 %s1542, %s1543
      %s1545 = smul.addr %s1544, 4
      %s1546 = scalar_lea.vmem %s5, %s1545
      // Predicated region
      $region41: #{tpu_custom_call.1} parent=31 // pred_check
        %p1547 = pneg %p142
      $region42: #{tpu_custom_call.1} parent=31 // pred_check_branch
        %1549 = sbr.rel (%p1547) target = $region44
      $region43: #{tpu_custom_call.1} parent=31 // pred_region
        %s1550 = sld [smem:[#allocation6 + %s23]]
        %s1551 = smul.u32 16, %s1550
      $region44: #{tpu_custom_call.1} parent=31 // pred_fallthru
        _
    $region32: #{tpu_custom_call.1} parent=5 // pred_fallthru
      _
    %p1552 = scmp.le.s32.totalorder 2, %s13
    // Predicated region
    $region45: #{tpu_custom_call.1} parent=5 // pred_check
      %p1553 = pneg %p1552
    $region46: #{tpu_custom_call.1} parent=5 // pred_check_branch
      %1555 = sbr.rel (%p1553) target = $region48
    $region47: #{tpu_custom_call.1} parent=5 // pred_region
      %s1556 = ssub.s32 %s13, 2
      // Predicated region
      $region49: #{tpu_custom_call.1} parent=47 // pred_check
        %p1557 = pneg %p148
      $region50: #{tpu_custom_call.1} parent=47 // pred_check_branch
        %1559 = sbr.rel (%p1557) target = $region52
      $region51: #{tpu_custom_call.1} parent=47 // pred_region
        %s1560 = sld [smem:[#allocation6 + %s25]]
        %s1561 = smul.u32 16, %s1560
        %p1562 = scmp.lt.s32.totalorder %s24, 3
        %s1563 = scalar_select %p1562, %s24, 3
        %p1564 = scmp.lt.s32.totalorder %s1561, 15
        %s1565 = scalar_select %p1564, %s1561, 15
        %s1566 = smul.addr %s1563, 16
        %s1567 = sadd.s32 %s1565, %s1566
        %s1568 = smul.addr %s1567, 4
        %s1569 = scalar_lea.vmem %s5, %s1568
      $region52: #{tpu_custom_call.1} parent=47 // pred_fallthru
        _
    $region48: #{tpu_custom_call.1} parent=5 // pred_fallthru
      _
  $region6: #{tpu_custom_call.1} parent=0 // loop_footer
    %s17 = sadd.s32 1, %s13
  $region7: #{tpu_custom_call.1} parent=0 // loop_footer_branch
    %12 = sbr.rel target = $region3
  $region8: #{tpu_custom_call.1} parent=0 // loop_exit
    _

</llo_original>
